<compile_context>
chip_gen: v7x
topology: tpu7x:2x2x1
jax: 0.10.0
libtpu: 0.0.40
codegen_flags: <defaults>
</compile_context>

<pallas_src>
import functools

import jax
import jax.numpy as jnp
import numpy as np
from jax.experimental import pallas as pl
from jax.experimental.pallas import tpu as pltpu


def _conv3x3_ps_relu_kernel(xp_ref, w_ref, b_ref, o_ref, *, N, H, W, Cin, Ct):
    # xp_ref: (N, H+2, (W+2)*Cin)  zero-padded, channel-packed input
    # w_ref : (9, W*Cin, W*Ct)     block-diagonal tap weights, tap index = ky*3+kx
    # b_ref : (1, W*Ct)            bias tiled over W
    # o_ref : (N, H, W*Ct)         conv + bias + ReLU output (pre pixel-shuffle)
    bias_b = jnp.broadcast_to(b_ref[...], (H, W * Ct))   # hoisted once
    for n in range(N):                                   # static, N=2
        acc = bias_b                                     # bias folded into init
        for ky in range(3):                              # 9 MXU dots per batch
            for kx in range(3):
                a = xp_ref[n, ky:ky + H, kx * Cin:kx * Cin + W * Cin]  # (H, W*Cin)
                acc = acc + jnp.dot(a, w_ref[ky * 3 + kx],
                                    preferred_element_type=jnp.float32)
        # Single lane-dense (H, W*Ct) = (16, 256) store per batch element.
        o_ref[n] = jnp.maximum(acc, 0.0).astype(o_ref.dtype)


@functools.partial(jax.jit, static_argnames=("stride",))
def block_forward(x_nchw, w_oihw, bias, stride):
    """x_nchw: (N, Cin, H, W) f32. Returns NCHW (N, Cout, H*s, W*s) f32."""
    N, Cin, H, W = x_nchw.shape
    Ct = w_oihw.shape[0]                     # = Cout * stride * stride
    s = stride
    Cout = Ct // (s * s)

    # --- input glue: NCHW -> NHWC, pad=1, pack channels into the lane axis ---
    x_nhwc = jnp.transpose(x_nchw, (0, 2, 3, 1))
    xp = jnp.pad(x_nhwc, ((0, 0), (1, 1), (1, 1), (0, 0)))
    xp_packed = xp.reshape(N, H + 2, (W + 2) * Cin)          # contiguous -> free

    # --- weight glue: OIHW -> 9 taps, then block-diagonal over the W axis so
    #     each tap becomes a single (W*Cin, W*Ct) dense matmul operand. ---
    wt = jnp.transpose(w_oihw, (2, 3, 1, 0)).reshape(9, Cin, Ct)   # (9, Cin, Ct)
    eye = jnp.eye(W, dtype=w_oihw.dtype)
    w_blk = jnp.einsum('wv,tio->twivo', eye, wt).reshape(9, W * Cin, W * Ct)
    b_tiled = jnp.tile(bias, W).reshape(1, W * Ct)

    kernel = functools.partial(_conv3x3_ps_relu_kernel,
                               N=N, H=H, W=W, Cin=Cin, Ct=Ct)

    y = pl.pallas_call(
        kernel,
        out_shape=jax.ShapeDtypeStruct((N, H, W * Ct), jnp.float32),
        grid_spec=pltpu.PrefetchScalarGridSpec(
            num_scalar_prefetch=0,
            grid=(1,),                                   # single step; batch folded in
            in_specs=[
                pl.BlockSpec((N, H + 2, (W + 2) * Cin), lambda i: (0, 0, 0)),
                pl.BlockSpec((9, W * Cin, W * Ct), lambda i: (0, 0, 0)),
                pl.BlockSpec((1, W * Ct), lambda i: (0, 0)),
            ],
            out_specs=pl.BlockSpec((N, H, W * Ct), lambda i: (0, 0, 0)),
        ),
        compiler_params=pltpu.CompilerParams(dimension_semantics=("arbitrary",)),
    )(xp_packed, w_blk, b_tiled)

    # --- output glue: PixelShuffle(s) + NHWC -> NCHW.  The reshapes are
    #     contiguous (free); only the transpose is a real (tiny, fused) pass.
    y = y.reshape(N, H, W, Cout, s, s)
    y = jnp.transpose(y, (0, 3, 1, 4, 2, 5)).reshape(N, Cout, H * s, W * s)
    return y


def _reference(x_nchw, w_oihw, bias, stride):
    """Pure-JAX reference of the same Block forward (for sanity checking)."""
    N, Cin, H, W = x_nchw.shape
    Ct = w_oihw.shape[0]
    s = stride
    Cout = Ct // (s * s)
    y = jax.lax.conv_general_dilated(
        x_nchw, w_oihw, window_strides=(1, 1), padding=((1, 1), (1, 1)),
        dimension_numbers=("NCHW", "OIHW", "NCHW"))
    y = y + bias[None, :, None, None]
    y = y.reshape(N, Cout, s, s, H, W)
    y = jnp.transpose(y, (0, 1, 4, 2, 5, 3)).reshape(N, Cout, H * s, W * s)
    return jnp.maximum(y, 0.0)


if __name__ == "__main__":
    # Small shapes consistent with the module: N=2, Cin=4, H=W=16, Cout=4, stride=2
    N, Cin, H, W = 2, 4, 16, 16
    Cout, stride = 4, 2
    Ct = Cout * stride * stride

    key = jax.random.PRNGKey(0)
    kx, kw, kb = jax.random.split(key, 3)
    x = jax.random.normal(kx, (N, Cin, H, W), dtype=jnp.float32)
    # Conv2d weight is OIHW: (Cout*s*s, Cin, 3, 3).
    w = jax.random.normal(kw, (Ct, Cin, 3, 3), dtype=jnp.float32) * 0.1
    b = jax.random.normal(kb, (Ct,), dtype=jnp.float32) * 0.1

    out = block_forward(x, w, b, stride)
    out = jax.block_until_ready(out)

    ref = jax.block_until_ready(_reference(x, w, b, stride))
    assert out.shape == (N, Cout, H * stride, W * stride)
    np.testing.assert_allclose(np.asarray(out), np.asarray(ref), rtol=1e-4, atol=1e-4)

    print("KERNEL_OK")
</pallas_src>

<mosaic_0001>
module attributes {stable_mosaic.version = 11 : i64} {
  func.func @_conv3x3_ps_relu_kernel(%arg0: i32, %arg1: memref<2x18x72xf32, #tpu.memory_space<vmem>>, %arg2: memref<9x64x256xf32, #tpu.memory_space<vmem>>, %arg3: memref<1x256xf32, #tpu.memory_space<vmem>>, %arg4: memref<2x16x256xf32, #tpu.memory_space<vmem>>) attributes {dimension_semantics = [#tpu.dimension_semantics<arbitrary>], iteration_bounds = array<i64: 1>, scalar_prefetch = 0 : i64, scratch_operands = 0 : i64, tpu.core_type = #tpu.core_type<tc>, window_params = [{pipeline_mode = #tpu.pipeline_mode<synchronous>, transform_indices = @transform_0, window_bounds = array<i64: 2, 18, 72>}, {pipeline_mode = #tpu.pipeline_mode<synchronous>, transform_indices = @transform_1, window_bounds = array<i64: 9, 64, 256>}, {pipeline_mode = #tpu.pipeline_mode<synchronous>, transform_indices = @transform_2, window_bounds = array<i64: 1, 256>}, {pipeline_mode = #tpu.pipeline_mode<synchronous>, transform_indices = @transform_3, window_bounds = array<i64: 2, 16, 256>}]} {
    %c0 = arith.constant 0 : index
    %c0_0 = arith.constant 0 : index
    %0 = vector.load %arg3[%c0, %c0_0] : memref<1x256xf32, #tpu.memory_space<vmem>>, vector<1x256xf32>
    %1 = vector.shape_cast %0 : vector<1x256xf32> to vector<1x256xf32>
    %2 = vector.broadcast %1 : vector<1x256xf32> to vector<16x256xf32>
    %c0_1 = arith.constant 0 : index
    %c0_2 = arith.constant 0 : index
    %c0_3 = arith.constant 0 : index
    %3 = vector.load %arg1[%c0_1, %c0_2, %c0_3] : memref<2x18x72xf32, #tpu.memory_space<vmem>>, vector<1x16x64xf32>
    %4 = vector.shape_cast %3 : vector<1x16x64xf32> to vector<16x64xf32>
    %c0_4 = arith.constant 0 : index
    %c0_5 = arith.constant 0 : index
    %c0_6 = arith.constant 0 : index
    %5 = vector.load %arg2[%c0_4, %c0_5, %c0_6] : memref<9x64x256xf32, #tpu.memory_space<vmem>>, vector<1x64x256xf32>
    %6 = vector.shape_cast %5 : vector<1x64x256xf32> to vector<64x256xf32>
    %cst = arith.constant dense<0.000000e+00> : vector<16x256xf32>
    %7 = tpu.matmul %4, %6, %cst {dimension_numbers = #tpu.dot_dimension_numbers<[1], [0], [0], [1], [0, 0, 1, 1], [], []>} : vector<16x64xf32>, vector<64x256xf32>, vector<16x256xf32> -> vector<16x256xf32>
    %8 = arith.addf %2, %7 : vector<16x256xf32>
    %c0_7 = arith.constant 0 : index
    %c0_8 = arith.constant 0 : index
    %c4 = arith.constant 4 : index
    %9 = vector.load %arg1[%c0_7, %c0_8, %c4] : memref<2x18x72xf32, #tpu.memory_space<vmem>>, vector<1x16x64xf32>
    %10 = vector.shape_cast %9 : vector<1x16x64xf32> to vector<16x64xf32>
    %c1 = arith.constant 1 : index
    %c0_9 = arith.constant 0 : index
    %c0_10 = arith.constant 0 : index
    %11 = vector.load %arg2[%c1, %c0_9, %c0_10] : memref<9x64x256xf32, #tpu.memory_space<vmem>>, vector<1x64x256xf32>
    %12 = vector.shape_cast %11 : vector<1x64x256xf32> to vector<64x256xf32>
    %cst_11 = arith.constant dense<0.000000e+00> : vector<16x256xf32>
    %13 = tpu.matmul %10, %12, %cst_11 {dimension_numbers = #tpu.dot_dimension_numbers<[1], [0], [0], [1], [0, 0, 1, 1], [], []>} : vector<16x64xf32>, vector<64x256xf32>, vector<16x256xf32> -> vector<16x256xf32>
    %14 = arith.addf %8, %13 : vector<16x256xf32>
    %c0_12 = arith.constant 0 : index
    %c0_13 = arith.constant 0 : index
    %c8 = arith.constant 8 : index
    %15 = vector.load %arg1[%c0_12, %c0_13, %c8] : memref<2x18x72xf32, #tpu.memory_space<vmem>>, vector<1x16x64xf32>
    %16 = vector.shape_cast %15 : vector<1x16x64xf32> to vector<16x64xf32>
    %c2 = arith.constant 2 : index
    %c0_14 = arith.constant 0 : index
    %c0_15 = arith.constant 0 : index
    %17 = vector.load %arg2[%c2, %c0_14, %c0_15] : memref<9x64x256xf32, #tpu.memory_space<vmem>>, vector<1x64x256xf32>
    %18 = vector.shape_cast %17 : vector<1x64x256xf32> to vector<64x256xf32>
    %cst_16 = arith.constant dense<0.000000e+00> : vector<16x256xf32>
    %19 = tpu.matmul %16, %18, %cst_16 {dimension_numbers = #tpu.dot_dimension_numbers<[1], [0], [0], [1], [0, 0, 1, 1], [], []>} : vector<16x64xf32>, vector<64x256xf32>, vector<16x256xf32> -> vector<16x256xf32>
    %20 = arith.addf %14, %19 : vector<16x256xf32>
    %c0_17 = arith.constant 0 : index
    %c1_18 = arith.constant 1 : index
    %c0_19 = arith.constant 0 : index
    %21 = vector.load %arg1[%c0_17, %c1_18, %c0_19] : memref<2x18x72xf32, #tpu.memory_space<vmem>>, vector<1x16x64xf32>
    %22 = vector.shape_cast %21 : vector<1x16x64xf32> to vector<16x64xf32>
    %c3 = arith.constant 3 : index
    %c0_20 = arith.constant 0 : index
    %c0_21 = arith.constant 0 : index
    %23 = vector.load %arg2[%c3, %c0_20, %c0_21] : memref<9x64x256xf32, #tpu.memory_space<vmem>>, vector<1x64x256xf32>
    %24 = vector.shape_cast %23 : vector<1x64x256xf32> to vector<64x256xf32>
    %cst_22 = arith.constant dense<0.000000e+00> : vector<16x256xf32>
    %25 = tpu.matmul %22, %24, %cst_22 {dimension_numbers = #tpu.dot_dimension_numbers<[1], [0], [0], [1], [0, 0, 1, 1], [], []>} : vector<16x64xf32>, vector<64x256xf32>, vector<16x256xf32> -> vector<16x256xf32>
    %26 = arith.addf %20, %25 : vector<16x256xf32>
    %c0_23 = arith.constant 0 : index
    %c1_24 = arith.constant 1 : index
    %c4_25 = arith.constant 4 : index
    %27 = vector.load %arg1[%c0_23, %c1_24, %c4_25] : memref<2x18x72xf32, #tpu.memory_space<vmem>>, vector<1x16x64xf32>
    %28 = vector.shape_cast %27 : vector<1x16x64xf32> to vector<16x64xf32>
    %c4_26 = arith.constant 4 : index
    %c0_27 = arith.constant 0 : index
    %c0_28 = arith.constant 0 : index
    %29 = vector.load %arg2[%c4_26, %c0_27, %c0_28] : memref<9x64x256xf32, #tpu.memory_space<vmem>>, vector<1x64x256xf32>
    %30 = vector.shape_cast %29 : vector<1x64x256xf32> to vector<64x256xf32>
    %cst_29 = arith.constant dense<0.000000e+00> : vector<16x256xf32>
    %31 = tpu.matmul %28, %30, %cst_29 {dimension_numbers = #tpu.dot_dimension_numbers<[1], [0], [0], [1], [0, 0, 1, 1], [], []>} : vector<16x64xf32>, vector<64x256xf32>, vector<16x256xf32> -> vector<16x256xf32>
    %32 = arith.addf %26, %31 : vector<16x256xf32>
    %c0_30 = arith.constant 0 : index
    %c1_31 = arith.constant 1 : index
    %c8_32 = arith.constant 8 : index
    %33 = vector.load %arg1[%c0_30, %c1_31, %c8_32] : memref<2x18x72xf32, #tpu.memory_space<vmem>>, vector<1x16x64xf32>
    %34 = vector.shape_cast %33 : vector<1x16x64xf32> to vector<16x64xf32>
    %c5 = arith.constant 5 : index
    %c0_33 = arith.constant 0 : index
    %c0_34 = arith.constant 0 : index
    %35 = vector.load %arg2[%c5, %c0_33, %c0_34] : memref<9x64x256xf32, #tpu.memory_space<vmem>>, vector<1x64x256xf32>
    %36 = vector.shape_cast %35 : vector<1x64x256xf32> to vector<64x256xf32>
    %cst_35 = arith.constant dense<0.000000e+00> : vector<16x256xf32>
    %37 = tpu.matmul %34, %36, %cst_35 {dimension_numbers = #tpu.dot_dimension_numbers<[1], [0], [0], [1], [0, 0, 1, 1], [], []>} : vector<16x64xf32>, vector<64x256xf32>, vector<16x256xf32> -> vector<16x256xf32>
    %38 = arith.addf %32, %37 : vector<16x256xf32>
    %c0_36 = arith.constant 0 : index
    %c2_37 = arith.constant 2 : index
    %c0_38 = arith.constant 0 : index
    %39 = vector.load %arg1[%c0_36, %c2_37, %c0_38] : memref<2x18x72xf32, #tpu.memory_space<vmem>>, vector<1x16x64xf32>
    %40 = vector.shape_cast %39 : vector<1x16x64xf32> to vector<16x64xf32>
    %c6 = arith.constant 6 : index
    %c0_39 = arith.constant 0 : index
    %c0_40 = arith.constant 0 : index
    %41 = vector.load %arg2[%c6, %c0_39, %c0_40] : memref<9x64x256xf32, #tpu.memory_space<vmem>>, vector<1x64x256xf32>
    %42 = vector.shape_cast %41 : vector<1x64x256xf32> to vector<64x256xf32>
    %cst_41 = arith.constant dense<0.000000e+00> : vector<16x256xf32>
    %43 = tpu.matmul %40, %42, %cst_41 {dimension_numbers = #tpu.dot_dimension_numbers<[1], [0], [0], [1], [0, 0, 1, 1], [], []>} : vector<16x64xf32>, vector<64x256xf32>, vector<16x256xf32> -> vector<16x256xf32>
    %44 = arith.addf %38, %43 : vector<16x256xf32>
    %c0_42 = arith.constant 0 : index
    %c2_43 = arith.constant 2 : index
    %c4_44 = arith.constant 4 : index
    %45 = vector.load %arg1[%c0_42, %c2_43, %c4_44] : memref<2x18x72xf32, #tpu.memory_space<vmem>>, vector<1x16x64xf32>
    %46 = vector.shape_cast %45 : vector<1x16x64xf32> to vector<16x64xf32>
    %c7 = arith.constant 7 : index
    %c0_45 = arith.constant 0 : index
    %c0_46 = arith.constant 0 : index
    %47 = vector.load %arg2[%c7, %c0_45, %c0_46] : memref<9x64x256xf32, #tpu.memory_space<vmem>>, vector<1x64x256xf32>
    %48 = vector.shape_cast %47 : vector<1x64x256xf32> to vector<64x256xf32>
    %cst_47 = arith.constant dense<0.000000e+00> : vector<16x256xf32>
    %49 = tpu.matmul %46, %48, %cst_47 {dimension_numbers = #tpu.dot_dimension_numbers<[1], [0], [0], [1], [0, 0, 1, 1], [], []>} : vector<16x64xf32>, vector<64x256xf32>, vector<16x256xf32> -> vector<16x256xf32>
    %50 = arith.addf %44, %49 : vector<16x256xf32>
    %c0_48 = arith.constant 0 : index
    %c2_49 = arith.constant 2 : index
    %c8_50 = arith.constant 8 : index
    %51 = vector.load %arg1[%c0_48, %c2_49, %c8_50] : memref<2x18x72xf32, #tpu.memory_space<vmem>>, vector<1x16x64xf32>
    %52 = vector.shape_cast %51 : vector<1x16x64xf32> to vector<16x64xf32>
    %c8_51 = arith.constant 8 : index
    %c0_52 = arith.constant 0 : index
    %c0_53 = arith.constant 0 : index
    %53 = vector.load %arg2[%c8_51, %c0_52, %c0_53] : memref<9x64x256xf32, #tpu.memory_space<vmem>>, vector<1x64x256xf32>
    %54 = vector.shape_cast %53 : vector<1x64x256xf32> to vector<64x256xf32>
    %cst_54 = arith.constant dense<0.000000e+00> : vector<16x256xf32>
    %55 = tpu.matmul %52, %54, %cst_54 {dimension_numbers = #tpu.dot_dimension_numbers<[1], [0], [0], [1], [0, 0, 1, 1], [], []>} : vector<16x64xf32>, vector<64x256xf32>, vector<16x256xf32> -> vector<16x256xf32>
    %56 = arith.addf %50, %55 : vector<16x256xf32>
    %cst_55 = arith.constant 0.000000e+00 : f32
    %57 = vector.broadcast %cst_55 : f32 to vector<16x256xf32>
    %58 = arith.maximumf %56, %57 : vector<16x256xf32>
    %c0_56 = arith.constant 0 : index
    %c0_57 = arith.constant 0 : index
    %c0_58 = arith.constant 0 : index
    %59 = vector.load %arg4[%c0_56, %c0_57, %c0_58] : memref<2x16x256xf32, #tpu.memory_space<vmem>>, vector<1x16x256xf32>
    %60 = vector.shape_cast %59 : vector<1x16x256xf32> to vector<16x256xf32>
    %61 = vector.shape_cast %58 : vector<16x256xf32> to vector<1x16x256xf32>
    tpu.vector_store %arg4[%c0_56, %c0_57, %c0_58], %61 {strides = array<i32>} : memref<2x16x256xf32, #tpu.memory_space<vmem>>, vector<1x16x256xf32>,
    %c1_59 = arith.constant 1 : index
    %c0_60 = arith.constant 0 : index
    %c0_61 = arith.constant 0 : index
    %62 = vector.load %arg1[%c1_59, %c0_60, %c0_61] : memref<2x18x72xf32, #tpu.memory_space<vmem>>, vector<1x16x64xf32>
    %63 = vector.shape_cast %62 : vector<1x16x64xf32> to vector<16x64xf32>
    %c0_62 = arith.constant 0 : index
    %c0_63 = arith.constant 0 : index
    %c0_64 = arith.constant 0 : index
    %64 = vector.load %arg2[%c0_62, %c0_63, %c0_64] : memref<9x64x256xf32, #tpu.memory_space<vmem>>, vector<1x64x256xf32>
    %65 = vector.shape_cast %64 : vector<1x64x256xf32> to vector<64x256xf32>
    %cst_65 = arith.constant dense<0.000000e+00> : vector<16x256xf32>
    %66 = tpu.matmul %63, %65, %cst_65 {dimension_numbers = #tpu.dot_dimension_numbers<[1], [0], [0], [1], [0, 0, 1, 1], [], []>} : vector<16x64xf32>, vector<64x256xf32>, vector<16x256xf32> -> vector<16x256xf32>
    %67 = arith.addf %2, %66 : vector<16x256xf32>
    %c1_66 = arith.constant 1 : index
    %c0_67 = arith.constant 0 : index
    %c4_68 = arith.constant 4 : index
    %68 = vector.load %arg1[%c1_66, %c0_67, %c4_68] : memref<2x18x72xf32, #tpu.memory_space<vmem>>, vector<1x16x64xf32>
    %69 = vector.shape_cast %68 : vector<1x16x64xf32> to vector<16x64xf32>
    %c1_69 = arith.constant 1 : index
    %c0_70 = arith.constant 0 : index
    %c0_71 = arith.constant 0 : index
    %70 = vector.load %arg2[%c1_69, %c0_70, %c0_71] : memref<9x64x256xf32, #tpu.memory_space<vmem>>, vector<1x64x256xf32>
    %71 = vector.shape_cast %70 : vector<1x64x256xf32> to vector<64x256xf32>
    %cst_72 = arith.constant dense<0.000000e+00> : vector<16x256xf32>
    %72 = tpu.matmul %69, %71, %cst_72 {dimension_numbers = #tpu.dot_dimension_numbers<[1], [0], [0], [1], [0, 0, 1, 1], [], []>} : vector<16x64xf32>, vector<64x256xf32>, vector<16x256xf32> -> vector<16x256xf32>
    %73 = arith.addf %67, %72 : vector<16x256xf32>
    %c1_73 = arith.constant 1 : index
    %c0_74 = arith.constant 0 : index
    %c8_75 = arith.constant 8 : index
    %74 = vector.load %arg1[%c1_73, %c0_74, %c8_75] : memref<2x18x72xf32, #tpu.memory_space<vmem>>, vector<1x16x64xf32>
    %75 = vector.shape_cast %74 : vector<1x16x64xf32> to vector<16x64xf32>
    %c2_76 = arith.constant 2 : index
    %c0_77 = arith.constant 0 : index
    %c0_78 = arith.constant 0 : index
    %76 = vector.load %arg2[%c2_76, %c0_77, %c0_78] : memref<9x64x256xf32, #tpu.memory_space<vmem>>, vector<1x64x256xf32>
    %77 = vector.shape_cast %76 : vector<1x64x256xf32> to vector<64x256xf32>
    %cst_79 = arith.constant dense<0.000000e+00> : vector<16x256xf32>
    %78 = tpu.matmul %75, %77, %cst_79 {dimension_numbers = #tpu.dot_dimension_numbers<[1], [0], [0], [1], [0, 0, 1, 1], [], []>} : vector<16x64xf32>, vector<64x256xf32>, vector<16x256xf32> -> vector<16x256xf32>
    %79 = arith.addf %73, %78 : vector<16x256xf32>
    %c1_80 = arith.constant 1 : index
    %c1_81 = arith.constant 1 : index
    %c0_82 = arith.constant 0 : index
    %80 = vector.load %arg1[%c1_80, %c1_81, %c0_82] : memref<2x18x72xf32, #tpu.memory_space<vmem>>, vector<1x16x64xf32>
    %81 = vector.shape_cast %80 : vector<1x16x64xf32> to vector<16x64xf32>
    %c3_83 = arith.constant 3 : index
    %c0_84 = arith.constant 0 : index
    %c0_85 = arith.constant 0 : index
    %82 = vector.load %arg2[%c3_83, %c0_84, %c0_85] : memref<9x64x256xf32, #tpu.memory_space<vmem>>, vector<1x64x256xf32>
    %83 = vector.shape_cast %82 : vector<1x64x256xf32> to vector<64x256xf32>
    %cst_86 = arith.constant dense<0.000000e+00> : vector<16x256xf32>
    %84 = tpu.matmul %81, %83, %cst_86 {dimension_numbers = #tpu.dot_dimension_numbers<[1], [0], [0], [1], [0, 0, 1, 1], [], []>} : vector<16x64xf32>, vector<64x256xf32>, vector<16x256xf32> -> vector<16x256xf32>
    %85 = arith.addf %79, %84 : vector<16x256xf32>
    %c1_87 = arith.constant 1 : index
    %c1_88 = arith.constant 1 : index
    %c4_89 = arith.constant 4 : index
    %86 = vector.load %arg1[%c1_87, %c1_88, %c4_89] : memref<2x18x72xf32, #tpu.memory_space<vmem>>, vector<1x16x64xf32>
    %87 = vector.shape_cast %86 : vector<1x16x64xf32> to vector<16x64xf32>
    %c4_90 = arith.constant 4 : index
    %c0_91 = arith.constant 0 : index
    %c0_92 = arith.constant 0 : index
    %88 = vector.load %arg2[%c4_90, %c0_91, %c0_92] : memref<9x64x256xf32, #tpu.memory_space<vmem>>, vector<1x64x256xf32>
    %89 = vector.shape_cast %88 : vector<1x64x256xf32> to vector<64x256xf32>
    %cst_93 = arith.constant dense<0.000000e+00> : vector<16x256xf32>
    %90 = tpu.matmul %87, %89, %cst_93 {dimension_numbers = #tpu.dot_dimension_numbers<[1], [0], [0], [1], [0, 0, 1, 1], [], []>} : vector<16x64xf32>, vector<64x256xf32>, vector<16x256xf32> -> vector<16x256xf32>
    %91 = arith.addf %85, %90 : vector<16x256xf32>
    %c1_94 = arith.constant 1 : index
    %c1_95 = arith.constant 1 : index
    %c8_96 = arith.constant 8 : index
    %92 = vector.load %arg1[%c1_94, %c1_95, %c8_96] : memref<2x18x72xf32, #tpu.memory_space<vmem>>, vector<1x16x64xf32>
    %93 = vector.shape_cast %92 : vector<1x16x64xf32> to vector<16x64xf32>
    %c5_97 = arith.constant 5 : index
    %c0_98 = arith.constant 0 : index
    %c0_99 = arith.constant 0 : index
    %94 = vector.load %arg2[%c5_97, %c0_98, %c0_99] : memref<9x64x256xf32, #tpu.memory_space<vmem>>, vector<1x64x256xf32>
    %95 = vector.shape_cast %94 : vector<1x64x256xf32> to vector<64x256xf32>
    %cst_100 = arith.constant dense<0.000000e+00> : vector<16x256xf32>
    %96 = tpu.matmul %93, %95, %cst_100 {dimension_numbers = #tpu.dot_dimension_numbers<[1], [0], [0], [1], [0, 0, 1, 1], [], []>} : vector<16x64xf32>, vector<64x256xf32>, vector<16x256xf32> -> vector<16x256xf32>
    %97 = arith.addf %91, %96 : vector<16x256xf32>
    %c1_101 = arith.constant 1 : index
    %c2_102 = arith.constant 2 : index
    %c0_103 = arith.constant 0 : index
    %98 = vector.load %arg1[%c1_101, %c2_102, %c0_103] : memref<2x18x72xf32, #tpu.memory_space<vmem>>, vector<1x16x64xf32>
    %99 = vector.shape_cast %98 : vector<1x16x64xf32> to vector<16x64xf32>
    %c6_104 = arith.constant 6 : index
    %c0_105 = arith.constant 0 : index
    %c0_106 = arith.constant 0 : index
    %100 = vector.load %arg2[%c6_104, %c0_105, %c0_106] : memref<9x64x256xf32, #tpu.memory_space<vmem>>, vector<1x64x256xf32>
    %101 = vector.shape_cast %100 : vector<1x64x256xf32> to vector<64x256xf32>
    %cst_107 = arith.constant dense<0.000000e+00> : vector<16x256xf32>
    %102 = tpu.matmul %99, %101, %cst_107 {dimension_numbers = #tpu.dot_dimension_numbers<[1], [0], [0], [1], [0, 0, 1, 1], [], []>} : vector<16x64xf32>, vector<64x256xf32>, vector<16x256xf32> -> vector<16x256xf32>
    %103 = arith.addf %97, %102 : vector<16x256xf32>
    %c1_108 = arith.constant 1 : index
    %c2_109 = arith.constant 2 : index
    %c4_110 = arith.constant 4 : index
    %104 = vector.load %arg1[%c1_108, %c2_109, %c4_110] : memref<2x18x72xf32, #tpu.memory_space<vmem>>, vector<1x16x64xf32>
    %105 = vector.shape_cast %104 : vector<1x16x64xf32> to vector<16x64xf32>
    %c7_111 = arith.constant 7 : index
    %c0_112 = arith.constant 0 : index
    %c0_113 = arith.constant 0 : index
    %106 = vector.load %arg2[%c7_111, %c0_112, %c0_113] : memref<9x64x256xf32, #tpu.memory_space<vmem>>, vector<1x64x256xf32>
    %107 = vector.shape_cast %106 : vector<1x64x256xf32> to vector<64x256xf32>
    %cst_114 = arith.constant dense<0.000000e+00> : vector<16x256xf32>
    %108 = tpu.matmul %105, %107, %cst_114 {dimension_numbers = #tpu.dot_dimension_numbers<[1], [0], [0], [1], [0, 0, 1, 1], [], []>} : vector<16x64xf32>, vector<64x256xf32>, vector<16x256xf32> -> vector<16x256xf32>
    %109 = arith.addf %103, %108 : vector<16x256xf32>
    %c1_115 = arith.constant 1 : index
    %c2_116 = arith.constant 2 : index
    %c8_117 = arith.constant 8 : index
    %110 = vector.load %arg1[%c1_115, %c2_116, %c8_117] : memref<2x18x72xf32, #tpu.memory_space<vmem>>, vector<1x16x64xf32>
    %111 = vector.shape_cast %110 : vector<1x16x64xf32> to vector<16x64xf32>
    %c8_118 = arith.constant 8 : index
    %c0_119 = arith.constant 0 : index
    %c0_120 = arith.constant 0 : index
    %112 = vector.load %arg2[%c8_118, %c0_119, %c0_120] : memref<9x64x256xf32, #tpu.memory_space<vmem>>, vector<1x64x256xf32>
    %113 = vector.shape_cast %112 : vector<1x64x256xf32> to vector<64x256xf32>
    %cst_121 = arith.constant dense<0.000000e+00> : vector<16x256xf32>
    %114 = tpu.matmul %111, %113, %cst_121 {dimension_numbers = #tpu.dot_dimension_numbers<[1], [0], [0], [1], [0, 0, 1, 1], [], []>} : vector<16x64xf32>, vector<64x256xf32>, vector<16x256xf32> -> vector<16x256xf32>
    %115 = arith.addf %109, %114 : vector<16x256xf32>
    %cst_122 = arith.constant 0.000000e+00 : f32
    %116 = vector.broadcast %cst_122 : f32 to vector<16x256xf32>
    %117 = arith.maximumf %115, %116 : vector<16x256xf32>
    %c1_123 = arith.constant 1 : index
    %c0_124 = arith.constant 0 : index
    %c0_125 = arith.constant 0 : index
    %118 = vector.load %arg4[%c1_123, %c0_124, %c0_125] : memref<2x16x256xf32, #tpu.memory_space<vmem>>, vector<1x16x256xf32>
    %119 = vector.shape_cast %118 : vector<1x16x256xf32> to vector<16x256xf32>
    %120 = vector.shape_cast %117 : vector<16x256xf32> to vector<1x16x256xf32>
    tpu.vector_store %arg4[%c1_123, %c0_124, %c0_125], %120 {strides = array<i32>} : memref<2x16x256xf32, #tpu.memory_space<vmem>>, vector<1x16x256xf32>,
    return
  }
  func.func @transform_0(%arg0: i32) -> (i32, i32, i32) {
    %c0_i32 = arith.constant 0 : i32
    %c0_i32_0 = arith.constant 0 : i32
    %c0_i32_1 = arith.constant 0 : i32
    %c0_i32_2 = arith.constant 0 : i32
    return %c0_i32, %c0_i32_0, %c0_i32_1 : i32, i32, i32
  }
  func.func @transform_1(%arg0: i32) -> (i32, i32, i32) {
    %c0_i32 = arith.constant 0 : i32
    %c0_i32_0 = arith.constant 0 : i32
    %c0_i32_1 = arith.constant 0 : i32
    %c0_i32_2 = arith.constant 0 : i32
    return %c0_i32, %c0_i32_0, %c0_i32_1 : i32, i32, i32
  }
  func.func @transform_2(%arg0: i32) -> (i32, i32) {
    %c0_i32 = arith.constant 0 : i32
    %c0_i32_0 = arith.constant 0 : i32
    %c0_i32_1 = arith.constant 0 : i32
    return %c0_i32, %c0_i32_0 : i32, i32
  }
  func.func @transform_3(%arg0: i32) -> (i32, i32, i32) {
    %c0_i32 = arith.constant 0 : i32
    %c0_i32_0 = arith.constant 0 : i32
    %c0_i32_1 = arith.constant 0 : i32
    %c0_i32_2 = arith.constant 0 : i32
    return %c0_i32, %c0_i32_0, %c0_i32_1 : i32, i32, i32
  }
}

</mosaic_0001>

<llo_original>
// kernel: tile.8
$region0: #{tile.8}
  #allocation0 [shape = 's32[1]{0}', space=sflag, size = 0x4, scoped, tag = 'scoped memory for tile.8']
  %s0 = inlined_call_operand.vmem [shape: f32[16], index: 0, kind: input, shape index: {}]
  %s1 = inlined_call_operand.vmem [shape: f32[16,16], index: 1, kind: output, shape index: {}]
  // Predicated region
  $region2: #{tile.8} parent=0 // pred_check
    _
  $region3: #{tile.8} parent=0 // pred_check_branch
    %3 = sbr.rel (0) target = $region5
  $region4: #{tile.8} parent=0 // pred_region
    _
  $region5: #{tile.8} parent=0 // pred_fallthru
    _
  %v4 = vld [vmem:[%s0] ss:$0 sm:$0xff]
  %5 = vst [vmem:[%s1] sm:$0xff] %v4
  %s6 = scalar_lea.vmem %s1, 8
  %7 = vst [vmem:[%s6] sm:$0xff] %v4

// kernel: tile.9
$region0: #{tile.9}
  %s0 = inlined_call_operand.vmem [shape: f32[16,16], index: 0, kind: input, shape index: {}]
  %s1 = inlined_call_operand.vmem [shape: f32[1,256], index: 1, kind: output, shape index: {}]
  $region1: #{tile.9} parent=0
    #allocation0 [shape = 'u8[8192]{0}', space=vmem, size = 0x2000, scoped, tag = 'scoped mem for output reshape']
    %s2 = smov 3
    %v3 = vld [vmem:[%s0] ss:$8 sm:%s2]
    %vm4 = vcmask 130048
    %5 = vst.msk [vmem:[#allocation0] ss:$8 sm:$0x3] %vm4, %v3
    %s6 = scalar_lea.vmem %s0, 7
    %s7 = smov 3
    %v8 = vld [vmem:[%s6] ss:$8 sm:%s7]
    %9 = vrot.lane.b32.xlu0 %v8, 112
    %v10 = vpop.permute.xlu0 %9
    %vm11 = vcmask 1048448
    %12 = vst.msk [vmem:[#allocation0] ss:$8 sm:$0x3] %vm11, %v10
    %s13 = scalar_lea.vmem %s0, 6
    %s14 = smov 3
    %v15 = vld [vmem:[%s13] ss:$8 sm:%s14]
    %16 = vrot.lane.b32.xlu0 %v15, 96
    %v17 = vpop.permute.xlu0 %16
    %vm18 = vcmask 917248
    %19 = vst.msk [vmem:[#allocation0] ss:$8 sm:$0x3] %vm18, %v17
    %s20 = scalar_lea.vmem %s0, 5
    %s21 = smov 3
    %v22 = vld [vmem:[%s20] ss:$8 sm:%s21]
    %23 = vrot.lane.b32.xlu0 %v22, 80
    %v24 = vpop.permute.xlu0 %23
    %vm25 = vcmask 786048
    %26 = vst.msk [vmem:[#allocation0] ss:$8 sm:$0x3] %vm25, %v24
    %s27 = scalar_lea.vmem %s0, 4
    %s28 = smov 3
    %v29 = vld [vmem:[%s27] ss:$8 sm:%s28]
    %30 = vrot.lane.b32.xlu0 %v29, 64
    %v31 = vpop.permute.xlu0 %30
    %vm32 = vcmask 654848
    %33 = vst.msk [vmem:[#allocation0] ss:$8 sm:$0x3] %vm32, %v31
    %s34 = scalar_lea.vmem %s0, 3
    %s35 = smov 3
    %v36 = vld [vmem:[%s34] ss:$8 sm:%s35]
    %37 = vrot.lane.b32.xlu0 %v36, 48
    %v38 = vpop.permute.xlu0 %37
    %vm39 = vcmask 523648
    %40 = vst.msk [vmem:[#allocation0] ss:$8 sm:$0x3] %vm39, %v38
    %s41 = scalar_lea.vmem %s0, 2
    %s42 = smov 3
    %v43 = vld [vmem:[%s41] ss:$8 sm:%s42]
    %44 = vrot.lane.b32.xlu0 %v43, 32
    %v45 = vpop.permute.xlu0 %44
    %vm46 = vcmask 392448
    %47 = vst.msk [vmem:[#allocation0] ss:$8 sm:$0x3] %vm46, %v45
    %s48 = scalar_lea.vmem %s0, 1
    %s49 = smov 3
    %v50 = vld [vmem:[%s48] ss:$8 sm:%s49]
    %51 = vrot.lane.b32.xlu0 %v50, 16
    %v52 = vpop.permute.xlu0 %51
    %vm53 = vcmask 261248
    %54 = vst.msk [vmem:[#allocation0] ss:$8 sm:$0x3] %vm53, %v52
    %s56 = sshllo.u32 0, 1
    %v58 = vld [vmem:[#allocation0] sm:%s56]
    %s59 = sshllo.u32 0, 1
    %60 = vst [vmem:[%s1] sm:%s59] %v58
    %s61 = scalar_lea.vmem [#allocation0], 8
    %v62 = vld [vmem:[%s61] sm:%s56]
    %s63 = sshllo.u32 0, 1
    %s64 = scalar_lea.vmem %s1, 1
    %65 = vst [vmem:[%s64] sm:%s63] %v62

// kernel: block_forward.1
$region0: #{block_forward.1}
  #allocation0 [shape = 'u32[]', space=smem, size = 0x4, offset = 0x4, fixed_abs, tag = 'smem constant byte address 0x4 - core index']
  #allocation1 [shape = 'u32[144,128]{1,0:T(1,128)}', space=vmem, size = 0x12000, scoped, tag = 'internal scratch']
  %s0 = inlined_call_operand.vmem [shape: f32[2,18,72], index: 0, kind: input, shape index: {}]
  %s1 = inlined_call_operand.vmem [shape: f32[9,64,256], index: 1, kind: input, shape index: {}]
  %s2 = inlined_call_operand.vmem [shape: f32[1,256], index: 2, kind: input, shape index: {}]
  %s3 = inlined_call_operand.vmem [shape: f32[2,16,256], index: 3, kind: output, shape index: {}]
  %s4 = sld [smem:[#allocation0]]
  $region22: #{block_forward.1} parent=0
    _
  %s6 = ssub.s32 1, %s4
  %s7 = scalar_select 0, %s6, %s4
  // Predicated region
  $region2: #{block_forward.1} parent=0 // pred_check
    _
  $region3: #{block_forward.1} parent=0 // pred_check_branch
    %9 = sbr.rel (0) target = $region5
  $region4: #{block_forward.1} parent=0 // pred_region
    _
  $region5: #{block_forward.1} parent=0 // pred_fallthru
    _
  // Predicated region
  $region6: #{block_forward.1} parent=0 // pred_check
    _
  $region7: #{block_forward.1} parent=0 // pred_check_branch
    %11 = sbr.rel (0) target = $region9
  $region8: #{block_forward.1} parent=0 // pred_region
    _
  $region9: #{block_forward.1} parent=0 // pred_fallthru
    _
  // Predicated region
  $region10: #{block_forward.1} parent=0 // pred_check
    _
  $region11: #{block_forward.1} parent=0 // pred_check_branch
    %13 = sbr.rel (0) target = $region13
  $region12: #{block_forward.1} parent=0 // pred_region
    _
  $region13: #{block_forward.1} parent=0 // pred_fallthru
    _
  %v14 = vld [vmem:[%s2] sm:$0x3]
  %v16 = vlaneseq
  %v17 = vshrl.u32 %v16, 7
  %v18 = vsub.s32 0, %v17
  %v19 = vrot.slane %v14, %v18
  %v20 = vlaneseq
  %v21 = vshrl.u32 %v20, 7
  %v22 = vsub.s32 1, %v21
  %v23 = vrot.slane %v14, %v22
  %v26 = vld [vmem:[%s0] sm:$0xff]
  %v27 = vld [vmem:[%s0 + $0x8] sm:$0xff]
  %v28 = vld [vmem:[%s1] sm:$0xff]
  %v29 = vld [vmem:[%s1 + $0x8] sm:$0xff]
  %v30 = vld [vmem:[%s1 + $0x10] sm:$0xff]
  %v31 = vld [vmem:[%s1 + $0x18] sm:$0xff]
  %v32 = vld [vmem:[%s1 + $0x20] sm:$0xff]
  %v33 = vld [vmem:[%s1 + $0x28] sm:$0xff]
  %v34 = vld [vmem:[%s1 + $0x30] sm:$0xff]
  %v35 = vld [vmem:[%s1 + $0x38] sm:$0xff]
  %v36 = vld [vmem:[%s1 + $0x40] sm:$0xff]
  %v37 = vld [vmem:[%s1 + $0x48] sm:$0xff]
  %v38 = vld [vmem:[%s1 + $0x50] sm:$0xff]
  %v39 = vld [vmem:[%s1 + $0x58] sm:$0xff]
  %v40 = vld [vmem:[%s1 + $0x60] sm:$0xff]
  %v41 = vld [vmem:[%s1 + $0x68] sm:$0xff]
  %v42 = vld [vmem:[%s1 + $0x70] sm:$0xff]
  %v43 = vld [vmem:[%s1 + $0x78] sm:$0xff]
  %vm44 = vcmask 523264
  %v46 = vsel %vm44, %v26, 0
  %v49 = vsel %vm44, %v27, 0
  %51 = vmatprep.subr.mxu0 %v29
  %52 = vmatpush1.msra.mxu0 %v28
  %53 = vmatprep.subr.mxu0 %v31
  %54 = vmatpush1.msra.mxu0 %v30
  %55 = vmatprep.subr.mxu0 %v33
  %56 = vmatpush1.msra.mxu0 %v32
  %57 = vmatprep.subr.mxu0 %v35
  %58 = vmatpush1.msra.mxu0 %v34
  %59 = vmatprep.subr.mxu0 %v37
  %60 = vmatpush1.msra.mxu0 %v36
  %61 = vmatprep.subr.mxu0 %v39
  %62 = vmatpush1.msra.mxu0 %v38
  %63 = vmatprep.subr.mxu0 %v41
  %64 = vmatpush1.msra.mxu0 %v40
  %65 = vmatprep.subr.mxu0 %v43
  %66 = vmatpush1.msra.mxu0 %v42
  %67 = vmatprep.subr.mxu0 0.0
  %68 = vmatpush1.msra.mxu0 0.0
  %69 = vmatprep.subr.mxu0 0.0
  %70 = vmatpush1.msra.mxu0 0.0
  %71 = vmatprep.subr.mxu0 0.0
  %72 = vmatpush1.msra.mxu0 0.0
  %73 = vmatprep.subr.mxu0 0.0
  %74 = vmatpush1.msra.mxu0 0.0
  %75 = vmatprep.subr.mxu0 0.0
  %76 = vmatpush1.msra.mxu0 0.0
  %77 = vmatprep.subr.mxu0 0.0
  %78 = vmatpush1.msra.mxu0 0.0
  %79 = vmatprep.subr.mxu0 0.0
  %80 = vmatpush1.msra.mxu0 0.0
  %81 = vmatprep.subr.mxu0 0.0
  %82 = vmatpush1.msra.mxu0 0.0
  %83 = vmatprep.subr.mxu0 0.0
  %84 = vmatpush1.msra.mxu0 0.0
  %85 = vmatprep.subr.mxu0 0.0
  %86 = vmatpush1.msra.mxu0 0.0
  %87 = vmatprep.subr.mxu0 0.0
  %88 = vmatpush1.msra.mxu0 0.0
  %89 = vmatprep.subr.mxu0 0.0
  %90 = vmatpush1.msra.mxu0 0.0
  %91 = vmatprep.subr.mxu0 0.0
  %92 = vmatpush1.msra.mxu0 0.0
  %93 = vmatprep.subr.mxu0 0.0
  %94 = vmatpush1.msra.mxu0 0.0
  %95 = vmatprep.subr.mxu0 0.0
  %96 = vmatpush1.msra.mxu0 0.0
  %97 = vmatprep.subr.mxu0 0.0
  %98 = vmatpush1.msra.mxu0 0.0
  %99 = vmatprep.subr.mxu0 0.0
  %100 = vmatpush1.msra.mxu0 0.0
  %101 = vmatprep.subr.mxu0 0.0
  %102 = vmatpush1.msra.mxu0 0.0
  %103 = vmatprep.subr.mxu0 0.0
  %104 = vmatpush1.msra.mxu0 0.0
  %105 = vmatprep.subr.mxu0 0.0
  %106 = vmatpush1.msra.mxu0 0.0
  %107 = vmatprep.subr.mxu0 0.0
  %108 = vmatpush1.msra.mxu0 0.0
  %109 = vmatprep.subr.mxu0 0.0
  %110 = vmatpush1.msra.mxu0 0.0
  %111 = vmatprep.subr.mxu0 0.0
  %112 = vmatpush1.msra.mxu0 0.0
  %113 = vmatprep.subr.mxu0 0.0
  %114 = vmatpush1.msra.mxu0 0.0
  %115 = vmatprep.mubr.f32.mxu0 0.0
  %116 = vmatmul.mubr.f32.gmra.mrb[0].mxu0 %v46
  %v117 = vpop.f32.mrb[0].mxu0
  %v118 = vadd.f32 0.0, %v117
  %v119 = vpop.f32.mrb[0].mxu0
  %v120 = vadd.f32 0.0, %v119
  %121 = vmatprep.mubr.f32.mxu0 0.0
  %122 = vmatmul.mubr.f32.gmra.mrb[0].mxu0 %v49
  %v123 = vpop.f32.mrb[0].mxu0
  %v124 = vadd.f32 0.0, %v123
  %v125 = vpop.f32.mrb[0].mxu0
  %v126 = vadd.f32 0.0, %v125
  %127 = vdwg.mxu0
  %v128 = vadd.f32 %v19, %v118
  %v129 = vadd.f32 %v23, %v120
  %v130 = vadd.f32 %v19, %v124
  %v131 = vadd.f32 %v23, %v126
  %s132 = scalar_lea.vmem %s1, 128
  %v133 = vld [vmem:[%s132] sm:$0xff]
  %v134 = vld [vmem:[%s132 + $0x8] sm:$0xff]
  %v135 = vld [vmem:[%s132 + $0x10] sm:$0xff]
  %v136 = vld [vmem:[%s132 + $0x18] sm:$0xff]
  %v137 = vld [vmem:[%s132 + $0x20] sm:$0xff]
  %v138 = vld [vmem:[%s132 + $0x28] sm:$0xff]
  %v139 = vld [vmem:[%s132 + $0x30] sm:$0xff]
  %v140 = vld [vmem:[%s132 + $0x38] sm:$0xff]
  %v141 = vld [vmem:[%s132 + $0x40] sm:$0xff]
  %v142 = vld [vmem:[%s132 + $0x48] sm:$0xff]
  %v143 = vld [vmem:[%s132 + $0x50] sm:$0xff]
  %v144 = vld [vmem:[%s132 + $0x58] sm:$0xff]
  %v145 = vld [vmem:[%s132 + $0x60] sm:$0xff]
  %v146 = vld [vmem:[%s132 + $0x68] sm:$0xff]
  %v147 = vld [vmem:[%s132 + $0x70] sm:$0xff]
  %v148 = vld [vmem:[%s132 + $0x78] sm:$0xff]
  %149 = vrot.lane.b32.xlu0 %v26, 124
  %v150 = vpop.permute.xlu0 %149
  %151 = vrot.lane.b32.xlu0 %v27, 124
  %v152 = vpop.permute.xlu0 %151
  %v153 = vsel %vm44, %v150, 0
  %v155 = vsel %vm44, %v152, 0
  %157 = vmatprep.subr.mxu0 %v134
  %158 = vmatpush1.msra.mxu0 %v133
  %159 = vmatprep.subr.mxu0 %v136
  %160 = vmatpush1.msra.mxu0 %v135
  %161 = vmatprep.subr.mxu0 %v138
  %162 = vmatpush1.msra.mxu0 %v137
  %163 = vmatprep.subr.mxu0 %v140
  %164 = vmatpush1.msra.mxu0 %v139
  %165 = vmatprep.subr.mxu0 %v142
  %166 = vmatpush1.msra.mxu0 %v141
  %167 = vmatprep.subr.mxu0 %v144
  %168 = vmatpush1.msra.mxu0 %v143
  %169 = vmatprep.subr.mxu0 %v146
  %170 = vmatpush1.msra.mxu0 %v145
  %171 = vmatprep.subr.mxu0 %v148
  %172 = vmatpush1.msra.mxu0 %v147
  %173 = vmatprep.subr.mxu0 0.0
  %174 = vmatpush1.msra.mxu0 0.0
  %175 = vmatprep.subr.mxu0 0.0
  %176 = vmatpush1.msra.mxu0 0.0
  %177 = vmatprep.subr.mxu0 0.0
  %178 = vmatpush1.msra.mxu0 0.0
  %179 = vmatprep.subr.mxu0 0.0
  %180 = vmatpush1.msra.mxu0 0.0
  %181 = vmatprep.subr.mxu0 0.0
  %182 = vmatpush1.msra.mxu0 0.0
  %183 = vmatprep.subr.mxu0 0.0
  %184 = vmatpush1.msra.mxu0 0.0
  %185 = vmatprep.subr.mxu0 0.0
  %186 = vmatpush1.msra.mxu0 0.0
  %187 = vmatprep.subr.mxu0 0.0
  %188 = vmatpush1.msra.mxu0 0.0
  %189 = vmatprep.subr.mxu0 0.0
  %190 = vmatpush1.msra.mxu0 0.0
  %191 = vmatprep.subr.mxu0 0.0
  %192 = vmatpush1.msra.mxu0 0.0
  %193 = vmatprep.subr.mxu0 0.0
  %194 = vmatpush1.msra.mxu0 0.0
  %195 = vmatprep.subr.mxu0 0.0
  %196 = vmatpush1.msra.mxu0 0.0
  %197 = vmatprep.subr.mxu0 0.0
  %198 = vmatpush1.msra.mxu0 0.0
  %199 = vmatprep.subr.mxu0 0.0
  %200 = vmatpush1.msra.mxu0 0.0
  %201 = vmatprep.subr.mxu0 0.0
  %202 = vmatpush1.msra.mxu0 0.0
  %203 = vmatprep.subr.mxu0 0.0
  %204 = vmatpush1.msra.mxu0 0.0
  %205 = vmatprep.subr.mxu0 0.0
  %206 = vmatpush1.msra.mxu0 0.0
  %207 = vmatprep.subr.mxu0 0.0
  %208 = vmatpush1.msra.mxu0 0.0
  %209 = vmatprep.subr.mxu0 0.0
  %210 = vmatpush1.msra.mxu0 0.0
  %211 = vmatprep.subr.mxu0 0.0
  %212 = vmatpush1.msra.mxu0 0.0
  %213 = vmatprep.subr.mxu0 0.0
  %214 = vmatpush1.msra.mxu0 0.0
  %215 = vmatprep.subr.mxu0 0.0
  %216 = vmatpush1.msra.mxu0 0.0
  %217 = vmatprep.subr.mxu0 0.0
  %218 = vmatpush1.msra.mxu0 0.0
  %219 = vmatprep.subr.mxu0 0.0
  %220 = vmatpush1.msra.mxu0 0.0
  %221 = vmatprep.mubr.f32.mxu0 0.0
  %222 = vmatmul.mubr.f32.gmra.mrb[0].mxu0 %v153
  %v223 = vpop.f32.mrb[0].mxu0
  %v224 = vadd.f32 0.0, %v223
  %v225 = vpop.f32.mrb[0].mxu0
  %v226 = vadd.f32 0.0, %v225
  %227 = vmatprep.mubr.f32.mxu0 0.0
  %228 = vmatmul.mubr.f32.gmra.mrb[0].mxu0 %v155
  %v229 = vpop.f32.mrb[0].mxu0
  %v230 = vadd.f32 0.0, %v229
  %v231 = vpop.f32.mrb[0].mxu0
  %v232 = vadd.f32 0.0, %v231
  %233 = vdwg.mxu0
  %v234 = vadd.f32 %v128, %v224
  %v235 = vadd.f32 %v129, %v226
  %v236 = vadd.f32 %v130, %v230
  %v237 = vadd.f32 %v131, %v232
  %s238 = scalar_lea.vmem %s1, 256
  %v239 = vld [vmem:[%s238] sm:$0xff]
  %v240 = vld [vmem:[%s238 + $0x8] sm:$0xff]
  %v241 = vld [vmem:[%s238 + $0x10] sm:$0xff]
  %v242 = vld [vmem:[%s238 + $0x18] sm:$0xff]
  %v243 = vld [vmem:[%s238 + $0x20] sm:$0xff]
  %v244 = vld [vmem:[%s238 + $0x28] sm:$0xff]
  %v245 = vld [vmem:[%s238 + $0x30] sm:$0xff]
  %v246 = vld [vmem:[%s238 + $0x38] sm:$0xff]
  %v247 = vld [vmem:[%s238 + $0x40] sm:$0xff]
  %v248 = vld [vmem:[%s238 + $0x48] sm:$0xff]
  %v249 = vld [vmem:[%s238 + $0x50] sm:$0xff]
  %v250 = vld [vmem:[%s238 + $0x58] sm:$0xff]
  %v251 = vld [vmem:[%s238 + $0x60] sm:$0xff]
  %v252 = vld [vmem:[%s238 + $0x68] sm:$0xff]
  %v253 = vld [vmem:[%s238 + $0x70] sm:$0xff]
  %v254 = vld [vmem:[%s238 + $0x78] sm:$0xff]
  %255 = vrot.lane.b32.xlu0 %v26, 120
  %v256 = vpop.permute.xlu0 %255
  %257 = vrot.lane.b32.xlu0 %v27, 120
  %v258 = vpop.permute.xlu0 %257
  %v259 = vsel %vm44, %v256, 0
  %v261 = vsel %vm44, %v258, 0
  %263 = vmatprep.subr.mxu0 %v240
  %264 = vmatpush1.msra.mxu0 %v239
  %265 = vmatprep.subr.mxu0 %v242
  %266 = vmatpush1.msra.mxu0 %v241
  %267 = vmatprep.subr.mxu0 %v244
  %268 = vmatpush1.msra.mxu0 %v243
  %269 = vmatprep.subr.mxu0 %v246
  %270 = vmatpush1.msra.mxu0 %v245
  %271 = vmatprep.subr.mxu0 %v248
  %272 = vmatpush1.msra.mxu0 %v247
  %273 = vmatprep.subr.mxu0 %v250
  %274 = vmatpush1.msra.mxu0 %v249
  %275 = vmatprep.subr.mxu0 %v252
  %276 = vmatpush1.msra.mxu0 %v251
  %277 = vmatprep.subr.mxu0 %v254
  %278 = vmatpush1.msra.mxu0 %v253
  %279 = vmatprep.subr.mxu0 0.0
  %280 = vmatpush1.msra.mxu0 0.0
  %281 = vmatprep.subr.mxu0 0.0
  %282 = vmatpush1.msra.mxu0 0.0
  %283 = vmatprep.subr.mxu0 0.0
  %284 = vmatpush1.msra.mxu0 0.0
  %285 = vmatprep.subr.mxu0 0.0
  %286 = vmatpush1.msra.mxu0 0.0
  %287 = vmatprep.subr.mxu0 0.0
  %288 = vmatpush1.msra.mxu0 0.0
  %289 = vmatprep.subr.mxu0 0.0
  %290 = vmatpush1.msra.mxu0 0.0
  %291 = vmatprep.subr.mxu0 0.0
  %292 = vmatpush1.msra.mxu0 0.0
  %293 = vmatprep.subr.mxu0 0.0
  %294 = vmatpush1.msra.mxu0 0.0
  %295 = vmatprep.subr.mxu0 0.0
  %296 = vmatpush1.msra.mxu0 0.0
  %297 = vmatprep.subr.mxu0 0.0
  %298 = vmatpush1.msra.mxu0 0.0
  %299 = vmatprep.subr.mxu0 0.0
  %300 = vmatpush1.msra.mxu0 0.0
  %301 = vmatprep.subr.mxu0 0.0
  %302 = vmatpush1.msra.mxu0 0.0
  %303 = vmatprep.subr.mxu0 0.0
  %304 = vmatpush1.msra.mxu0 0.0
  %305 = vmatprep.subr.mxu0 0.0
  %306 = vmatpush1.msra.mxu0 0.0
  %307 = vmatprep.subr.mxu0 0.0
  %308 = vmatpush1.msra.mxu0 0.0
  %309 = vmatprep.subr.mxu0 0.0
  %310 = vmatpush1.msra.mxu0 0.0
  %311 = vmatprep.subr.mxu0 0.0
  %312 = vmatpush1.msra.mxu0 0.0
  %313 = vmatprep.subr.mxu0 0.0
  %314 = vmatpush1.msra.mxu0 0.0
  %315 = vmatprep.subr.mxu0 0.0
  %316 = vmatpush1.msra.mxu0 0.0
  %317 = vmatprep.subr.mxu0 0.0
  %318 = vmatpush1.msra.mxu0 0.0
  %319 = vmatprep.subr.mxu0 0.0
  %320 = vmatpush1.msra.mxu0 0.0
  %321 = vmatprep.subr.mxu0 0.0
  %322 = vmatpush1.msra.mxu0 0.0
  %323 = vmatprep.subr.mxu0 0.0
  %324 = vmatpush1.msra.mxu0 0.0
  %325 = vmatprep.subr.mxu0 0.0
  %326 = vmatpush1.msra.mxu0 0.0
  %327 = vmatprep.mubr.f32.mxu0 0.0
  %328 = vmatmul.mubr.f32.gmra.mrb[0].mxu0 %v259
  %v329 = vpop.f32.mrb[0].mxu0
  %v330 = vadd.f32 0.0, %v329
  %v331 = vpop.f32.mrb[0].mxu0
  %v332 = vadd.f32 0.0, %v331
  %333 = vmatprep.mubr.f32.mxu0 0.0
  %334 = vmatmul.mubr.f32.gmra.mrb[0].mxu0 %v261
  %v335 = vpop.f32.mrb[0].mxu0
  %v336 = vadd.f32 0.0, %v335
  %v337 = vpop.f32.mrb[0].mxu0
  %v338 = vadd.f32 0.0, %v337
  %339 = vdwg.mxu0
  %v340 = vadd.f32 %v234, %v330
  %v341 = vadd.f32 %v235, %v332
  %v342 = vadd.f32 %v236, %v336
  %v343 = vadd.f32 %v237, %v338
  %v344 = vld [vmem:[%s0 + $0x1] sm:$0xff]
  %v345 = vld [vmem:[%s0 + $0x9] sm:$0xff]
  %s346 = scalar_lea.vmem %s1, 384
  %v347 = vld [vmem:[%s346] sm:$0xff]
  %v348 = vld [vmem:[%s346 + $0x8] sm:$0xff]
  %v349 = vld [vmem:[%s346 + $0x10] sm:$0xff]
  %v350 = vld [vmem:[%s346 + $0x18] sm:$0xff]
  %v351 = vld [vmem:[%s346 + $0x20] sm:$0xff]
  %v352 = vld [vmem:[%s346 + $0x28] sm:$0xff]
  %v353 = vld [vmem:[%s346 + $0x30] sm:$0xff]
  %v354 = vld [vmem:[%s346 + $0x38] sm:$0xff]
  %v355 = vld [vmem:[%s346 + $0x40] sm:$0xff]
  %v356 = vld [vmem:[%s346 + $0x48] sm:$0xff]
  %v357 = vld [vmem:[%s346 + $0x50] sm:$0xff]
  %v358 = vld [vmem:[%s346 + $0x58] sm:$0xff]
  %v359 = vld [vmem:[%s346 + $0x60] sm:$0xff]
  %v360 = vld [vmem:[%s346 + $0x68] sm:$0xff]
  %v361 = vld [vmem:[%s346 + $0x70] sm:$0xff]
  %v362 = vld [vmem:[%s346 + $0x78] sm:$0xff]
  %v364 = vsel %vm44, %v344, 0
  %v367 = vsel %vm44, %v345, 0
  %369 = vmatprep.subr.mxu0 %v348
  %370 = vmatpush1.msra.mxu0 %v347
  %371 = vmatprep.subr.mxu0 %v350
  %372 = vmatpush1.msra.mxu0 %v349
  %373 = vmatprep.subr.mxu0 %v352
  %374 = vmatpush1.msra.mxu0 %v351
  %375 = vmatprep.subr.mxu0 %v354
  %376 = vmatpush1.msra.mxu0 %v353
  %377 = vmatprep.subr.mxu0 %v356
  %378 = vmatpush1.msra.mxu0 %v355
  %379 = vmatprep.subr.mxu0 %v358
  %380 = vmatpush1.msra.mxu0 %v357
  %381 = vmatprep.subr.mxu0 %v360
  %382 = vmatpush1.msra.mxu0 %v359
  %383 = vmatprep.subr.mxu0 %v362
  %384 = vmatpush1.msra.mxu0 %v361
  %385 = vmatprep.subr.mxu0 0.0
  %386 = vmatpush1.msra.mxu0 0.0
  %387 = vmatprep.subr.mxu0 0.0
  %388 = vmatpush1.msra.mxu0 0.0
  %389 = vmatprep.subr.mxu0 0.0
  %390 = vmatpush1.msra.mxu0 0.0
  %391 = vmatprep.subr.mxu0 0.0
  %392 = vmatpush1.msra.mxu0 0.0
  %393 = vmatprep.subr.mxu0 0.0
  %394 = vmatpush1.msra.mxu0 0.0
  %395 = vmatprep.subr.mxu0 0.0
  %396 = vmatpush1.msra.mxu0 0.0
  %397 = vmatprep.subr.mxu0 0.0
  %398 = vmatpush1.msra.mxu0 0.0
  %399 = vmatprep.subr.mxu0 0.0
  %400 = vmatpush1.msra.mxu0 0.0
  %401 = vmatprep.subr.mxu0 0.0
  %402 = vmatpush1.msra.mxu0 0.0
  %403 = vmatprep.subr.mxu0 0.0
  %404 = vmatpush1.msra.mxu0 0.0
  %405 = vmatprep.subr.mxu0 0.0
  %406 = vmatpush1.msra.mxu0 0.0
  %407 = vmatprep.subr.mxu0 0.0
  %408 = vmatpush1.msra.mxu0 0.0
  %409 = vmatprep.subr.mxu0 0.0
  %410 = vmatpush1.msra.mxu0 0.0
  %411 = vmatprep.subr.mxu0 0.0
  %412 = vmatpush1.msra.mxu0 0.0
  %413 = vmatprep.subr.mxu0 0.0
  %414 = vmatpush1.msra.mxu0 0.0
  %415 = vmatprep.subr.mxu0 0.0
  %416 = vmatpush1.msra.mxu0 0.0
  %417 = vmatprep.subr.mxu0 0.0
  %418 = vmatpush1.msra.mxu0 0.0
  %419 = vmatprep.subr.mxu0 0.0
  %420 = vmatpush1.msra.mxu0 0.0
  %421 = vmatprep.subr.mxu0 0.0
  %422 = vmatpush1.msra.mxu0 0.0
  %423 = vmatprep.subr.mxu0 0.0
  %424 = vmatpush1.msra.mxu0 0.0
  %425 = vmatprep.subr.mxu0 0.0
  %426 = vmatpush1.msra.mxu0 0.0
  %427 = vmatprep.subr.mxu0 0.0
  %428 = vmatpush1.msra.mxu0 0.0
  %429 = vmatprep.subr.mxu0 0.0
  %430 = vmatpush1.msra.mxu0 0.0
  %431 = vmatprep.subr.mxu0 0.0
  %432 = vmatpush1.msra.mxu0 0.0
  %433 = vmatprep.mubr.f32.mxu0 0.0
  %434 = vmatmul.mubr.f32.gmra.mrb[0].mxu0 %v364
  %v435 = vpop.f32.mrb[0].mxu0
  %v436 = vadd.f32 0.0, %v435
  %v437 = vpop.f32.mrb[0].mxu0
  %v438 = vadd.f32 0.0, %v437
  %439 = vmatprep.mubr.f32.mxu0 0.0
  %440 = vmatmul.mubr.f32.gmra.mrb[0].mxu0 %v367
  %v441 = vpop.f32.mrb[0].mxu0
  %v442 = vadd.f32 0.0, %v441
  %v443 = vpop.f32.mrb[0].mxu0
  %v444 = vadd.f32 0.0, %v443
  %445 = vdwg.mxu0
  %v446 = vadd.f32 %v340, %v436
  %v447 = vadd.f32 %v341, %v438
  %v448 = vadd.f32 %v342, %v442
  %v449 = vadd.f32 %v343, %v444
  %s450 = scalar_lea.vmem %s1, 512
  %v451 = vld [vmem:[%s450] sm:$0xff]
  %v452 = vld [vmem:[%s450 + $0x8] sm:$0xff]
  %v453 = vld [vmem:[%s450 + $0x10] sm:$0xff]
  %v454 = vld [vmem:[%s450 + $0x18] sm:$0xff]
  %v455 = vld [vmem:[%s450 + $0x20] sm:$0xff]
  %v456 = vld [vmem:[%s450 + $0x28] sm:$0xff]
  %v457 = vld [vmem:[%s450 + $0x30] sm:$0xff]
  %v458 = vld [vmem:[%s450 + $0x38] sm:$0xff]
  %v459 = vld [vmem:[%s450 + $0x40] sm:$0xff]
  %v460 = vld [vmem:[%s450 + $0x48] sm:$0xff]
  %v461 = vld [vmem:[%s450 + $0x50] sm:$0xff]
  %v462 = vld [vmem:[%s450 + $0x58] sm:$0xff]
  %v463 = vld [vmem:[%s450 + $0x60] sm:$0xff]
  %v464 = vld [vmem:[%s450 + $0x68] sm:$0xff]
  %v465 = vld [vmem:[%s450 + $0x70] sm:$0xff]
  %v466 = vld [vmem:[%s450 + $0x78] sm:$0xff]
  %467 = vrot.lane.b32.xlu0 %v344, 124
  %v468 = vpop.permute.xlu0 %467
  %469 = vrot.lane.b32.xlu0 %v345, 124
  %v470 = vpop.permute.xlu0 %469
  %v471 = vsel %vm44, %v468, 0
  %v473 = vsel %vm44, %v470, 0
  %475 = vmatprep.subr.mxu0 %v452
  %476 = vmatpush1.msra.mxu0 %v451
  %477 = vmatprep.subr.mxu0 %v454
  %478 = vmatpush1.msra.mxu0 %v453
  %479 = vmatprep.subr.mxu0 %v456
  %480 = vmatpush1.msra.mxu0 %v455
  %481 = vmatprep.subr.mxu0 %v458
  %482 = vmatpush1.msra.mxu0 %v457
  %483 = vmatprep.subr.mxu0 %v460
  %484 = vmatpush1.msra.mxu0 %v459
  %485 = vmatprep.subr.mxu0 %v462
  %486 = vmatpush1.msra.mxu0 %v461
  %487 = vmatprep.subr.mxu0 %v464
  %488 = vmatpush1.msra.mxu0 %v463
  %489 = vmatprep.subr.mxu0 %v466
  %490 = vmatpush1.msra.mxu0 %v465
  %491 = vmatprep.subr.mxu0 0.0
  %492 = vmatpush1.msra.mxu0 0.0
  %493 = vmatprep.subr.mxu0 0.0
  %494 = vmatpush1.msra.mxu0 0.0
  %495 = vmatprep.subr.mxu0 0.0
  %496 = vmatpush1.msra.mxu0 0.0
  %497 = vmatprep.subr.mxu0 0.0
  %498 = vmatpush1.msra.mxu0 0.0
  %499 = vmatprep.subr.mxu0 0.0
  %500 = vmatpush1.msra.mxu0 0.0
  %501 = vmatprep.subr.mxu0 0.0
  %502 = vmatpush1.msra.mxu0 0.0
  %503 = vmatprep.subr.mxu0 0.0
  %504 = vmatpush1.msra.mxu0 0.0
  %505 = vmatprep.subr.mxu0 0.0
  %506 = vmatpush1.msra.mxu0 0.0
  %507 = vmatprep.subr.mxu0 0.0
  %508 = vmatpush1.msra.mxu0 0.0
  %509 = vmatprep.subr.mxu0 0.0
  %510 = vmatpush1.msra.mxu0 0.0
  %511 = vmatprep.subr.mxu0 0.0
  %512 = vmatpush1.msra.mxu0 0.0
  %513 = vmatprep.subr.mxu0 0.0
  %514 = vmatpush1.msra.mxu0 0.0
  %515 = vmatprep.subr.mxu0 0.0
  %516 = vmatpush1.msra.mxu0 0.0
  %517 = vmatprep.subr.mxu0 0.0
  %518 = vmatpush1.msra.mxu0 0.0
  %519 = vmatprep.subr.mxu0 0.0
  %520 = vmatpush1.msra.mxu0 0.0
  %521 = vmatprep.subr.mxu0 0.0
  %522 = vmatpush1.msra.mxu0 0.0
  %523 = vmatprep.subr.mxu0 0.0
  %524 = vmatpush1.msra.mxu0 0.0
  %525 = vmatprep.subr.mxu0 0.0
  %526 = vmatpush1.msra.mxu0 0.0
  %527 = vmatprep.subr.mxu0 0.0
  %528 = vmatpush1.msra.mxu0 0.0
  %529 = vmatprep.subr.mxu0 0.0
  %530 = vmatpush1.msra.mxu0 0.0
  %531 = vmatprep.subr.mxu0 0.0
  %532 = vmatpush1.msra.mxu0 0.0
  %533 = vmatprep.subr.mxu0 0.0
  %534 = vmatpush1.msra.mxu0 0.0
  %535 = vmatprep.subr.mxu0 0.0
  %536 = vmatpush1.msra.mxu0 0.0
  %537 = vmatprep.subr.mxu0 0.0
  %538 = vmatpush1.msra.mxu0 0.0
  %539 = vmatprep.mubr.f32.mxu0 0.0
  %540 = vmatmul.mubr.f32.gmra.mrb[0].mxu0 %v471
  %v541 = vpop.f32.mrb[0].mxu0
  %v542 = vadd.f32 0.0, %v541
  %v543 = vpop.f32.mrb[0].mxu0
  %v544 = vadd.f32 0.0, %v543
  %545 = vmatprep.mubr.f32.mxu0 0.0
  %546 = vmatmul.mubr.f32.gmra.mrb[0].mxu0 %v473
  %v547 = vpop.f32.mrb[0].mxu0
  %v548 = vadd.f32 0.0, %v547
  %v549 = vpop.f32.mrb[0].mxu0
  %v550 = vadd.f32 0.0, %v549
  %551 = vdwg.mxu0
  %v552 = vadd.f32 %v446, %v542
  %v553 = vadd.f32 %v447, %v544
  %v554 = vadd.f32 %v448, %v548
  %v555 = vadd.f32 %v449, %v550
  %s556 = scalar_lea.vmem %s1, 640
  %v557 = vld [vmem:[%s556] sm:$0xff]
  %v558 = vld [vmem:[%s556 + $0x8] sm:$0xff]
  %v559 = vld [vmem:[%s556 + $0x10] sm:$0xff]
  %v560 = vld [vmem:[%s556 + $0x18] sm:$0xff]
  %v561 = vld [vmem:[%s556 + $0x20] sm:$0xff]
  %v562 = vld [vmem:[%s556 + $0x28] sm:$0xff]
  %v563 = vld [vmem:[%s556 + $0x30] sm:$0xff]
  %v564 = vld [vmem:[%s556 + $0x38] sm:$0xff]
  %v565 = vld [vmem:[%s556 + $0x40] sm:$0xff]
  %v566 = vld [vmem:[%s556 + $0x48] sm:$0xff]
  %v567 = vld [vmem:[%s556 + $0x50] sm:$0xff]
  %v568 = vld [vmem:[%s556 + $0x58] sm:$0xff]
  %v569 = vld [vmem:[%s556 + $0x60] sm:$0xff]
  %v570 = vld [vmem:[%s556 + $0x68] sm:$0xff]
  %v571 = vld [vmem:[%s556 + $0x70] sm:$0xff]
  %v572 = vld [vmem:[%s556 + $0x78] sm:$0xff]
  %573 = vrot.lane.b32.xlu0 %v344, 120
  %v574 = vpop.permute.xlu0 %573
  %575 = vrot.lane.b32.xlu0 %v345, 120
  %v576 = vpop.permute.xlu0 %575
  %v577 = vsel %vm44, %v574, 0
  %v579 = vsel %vm44, %v576, 0
  %581 = vmatprep.subr.mxu0 %v558
  %582 = vmatpush1.msra.mxu0 %v557
  %583 = vmatprep.subr.mxu0 %v560
  %584 = vmatpush1.msra.mxu0 %v559
  %585 = vmatprep.subr.mxu0 %v562
  %586 = vmatpush1.msra.mxu0 %v561
  %587 = vmatprep.subr.mxu0 %v564
  %588 = vmatpush1.msra.mxu0 %v563
  %589 = vmatprep.subr.mxu0 %v566
  %590 = vmatpush1.msra.mxu0 %v565
  %591 = vmatprep.subr.mxu0 %v568
  %592 = vmatpush1.msra.mxu0 %v567
  %593 = vmatprep.subr.mxu0 %v570
  %594 = vmatpush1.msra.mxu0 %v569
  %595 = vmatprep.subr.mxu0 %v572
  %596 = vmatpush1.msra.mxu0 %v571
  %597 = vmatprep.subr.mxu0 0.0
  %598 = vmatpush1.msra.mxu0 0.0
  %599 = vmatprep.subr.mxu0 0.0
  %600 = vmatpush1.msra.mxu0 0.0
  %601 = vmatprep.subr.mxu0 0.0
  %602 = vmatpush1.msra.mxu0 0.0
  %603 = vmatprep.subr.mxu0 0.0
  %604 = vmatpush1.msra.mxu0 0.0
  %605 = vmatprep.subr.mxu0 0.0
  %606 = vmatpush1.msra.mxu0 0.0
  %607 = vmatprep.subr.mxu0 0.0
  %608 = vmatpush1.msra.mxu0 0.0
  %609 = vmatprep.subr.mxu0 0.0
  %610 = vmatpush1.msra.mxu0 0.0
  %611 = vmatprep.subr.mxu0 0.0
  %612 = vmatpush1.msra.mxu0 0.0
  %613 = vmatprep.subr.mxu0 0.0
  %614 = vmatpush1.msra.mxu0 0.0
  %615 = vmatprep.subr.mxu0 0.0
  %616 = vmatpush1.msra.mxu0 0.0
  %617 = vmatprep.subr.mxu0 0.0
  %618 = vmatpush1.msra.mxu0 0.0
  %619 = vmatprep.subr.mxu0 0.0
  %620 = vmatpush1.msra.mxu0 0.0
  %621 = vmatprep.subr.mxu0 0.0
  %622 = vmatpush1.msra.mxu0 0.0
  %623 = vmatprep.subr.mxu0 0.0
  %624 = vmatpush1.msra.mxu0 0.0
  %625 = vmatprep.subr.mxu0 0.0
  %626 = vmatpush1.msra.mxu0 0.0
  %627 = vmatprep.subr.mxu0 0.0
  %628 = vmatpush1.msra.mxu0 0.0
  %629 = vmatprep.subr.mxu0 0.0
  %630 = vmatpush1.msra.mxu0 0.0
  %631 = vmatprep.subr.mxu0 0.0
  %632 = vmatpush1.msra.mxu0 0.0
  %633 = vmatprep.subr.mxu0 0.0
  %634 = vmatpush1.msra.mxu0 0.0
  %635 = vmatprep.subr.mxu0 0.0
  %636 = vmatpush1.msra.mxu0 0.0
  %637 = vmatprep.subr.mxu0 0.0
  %638 = vmatpush1.msra.mxu0 0.0
  %639 = vmatprep.subr.mxu0 0.0
  %640 = vmatpush1.msra.mxu0 0.0
  %641 = vmatprep.subr.mxu0 0.0
  %642 = vmatpush1.msra.mxu0 0.0
  %643 = vmatprep.subr.mxu0 0.0
  %644 = vmatpush1.msra.mxu0 0.0
  %645 = vmatprep.mubr.f32.mxu0 0.0
  %646 = vmatmul.mubr.f32.gmra.mrb[0].mxu0 %v577
  %v647 = vpop.f32.mrb[0].mxu0
  %v648 = vadd.f32 0.0, %v647
  %v649 = vpop.f32.mrb[0].mxu0
  %v650 = vadd.f32 0.0, %v649
  %651 = vmatprep.mubr.f32.mxu0 0.0
  %652 = vmatmul.mubr.f32.gmra.mrb[0].mxu0 %v579
  %v653 = vpop.f32.mrb[0].mxu0
  %v654 = vadd.f32 0.0, %v653
  %v655 = vpop.f32.mrb[0].mxu0
  %v656 = vadd.f32 0.0, %v655
  %657 = vdwg.mxu0
  %v658 = vadd.f32 %v552, %v648
  %v659 = vadd.f32 %v553, %v650
  %v660 = vadd.f32 %v554, %v654
  %v661 = vadd.f32 %v555, %v656
  %v662 = vld [vmem:[%s0 + $0x2] sm:$0xff]
  %v663 = vld [vmem:[%s0 + $0xa] sm:$0xff]
  %s664 = scalar_lea.vmem %s1, 768
  %v665 = vld [vmem:[%s664] sm:$0xff]
  %v666 = vld [vmem:[%s664 + $0x8] sm:$0xff]
  %v667 = vld [vmem:[%s664 + $0x10] sm:$0xff]
  %v668 = vld [vmem:[%s664 + $0x18] sm:$0xff]
  %v669 = vld [vmem:[%s664 + $0x20] sm:$0xff]
  %v670 = vld [vmem:[%s664 + $0x28] sm:$0xff]
  %v671 = vld [vmem:[%s664 + $0x30] sm:$0xff]
  %v672 = vld [vmem:[%s664 + $0x38] sm:$0xff]
  %v673 = vld [vmem:[%s664 + $0x40] sm:$0xff]
  %v674 = vld [vmem:[%s664 + $0x48] sm:$0xff]
  %v675 = vld [vmem:[%s664 + $0x50] sm:$0xff]
  %v676 = vld [vmem:[%s664 + $0x58] sm:$0xff]
  %v677 = vld [vmem:[%s664 + $0x60] sm:$0xff]
  %v678 = vld [vmem:[%s664 + $0x68] sm:$0xff]
  %v679 = vld [vmem:[%s664 + $0x70] sm:$0xff]
  %v680 = vld [vmem:[%s664 + $0x78] sm:$0xff]
  %v682 = vsel %vm44, %v662, 0
  %v685 = vsel %vm44, %v663, 0
  %687 = vmatprep.subr.mxu0 %v666
  %688 = vmatpush1.msra.mxu0 %v665
  %689 = vmatprep.subr.mxu0 %v668
  %690 = vmatpush1.msra.mxu0 %v667
  %691 = vmatprep.subr.mxu0 %v670
  %692 = vmatpush1.msra.mxu0 %v669
  %693 = vmatprep.subr.mxu0 %v672
  %694 = vmatpush1.msra.mxu0 %v671
  %695 = vmatprep.subr.mxu0 %v674
  %696 = vmatpush1.msra.mxu0 %v673
  %697 = vmatprep.subr.mxu0 %v676
  %698 = vmatpush1.msra.mxu0 %v675
  %699 = vmatprep.subr.mxu0 %v678
  %700 = vmatpush1.msra.mxu0 %v677
  %701 = vmatprep.subr.mxu0 %v680
  %702 = vmatpush1.msra.mxu0 %v679
  %703 = vmatprep.subr.mxu0 0.0
  %704 = vmatpush1.msra.mxu0 0.0
  %705 = vmatprep.subr.mxu0 0.0
  %706 = vmatpush1.msra.mxu0 0.0
  %707 = vmatprep.subr.mxu0 0.0
  %708 = vmatpush1.msra.mxu0 0.0
  %709 = vmatprep.subr.mxu0 0.0
  %710 = vmatpush1.msra.mxu0 0.0
  %711 = vmatprep.subr.mxu0 0.0
  %712 = vmatpush1.msra.mxu0 0.0
  %713 = vmatprep.subr.mxu0 0.0
  %714 = vmatpush1.msra.mxu0 0.0
  %715 = vmatprep.subr.mxu0 0.0
  %716 = vmatpush1.msra.mxu0 0.0
  %717 = vmatprep.subr.mxu0 0.0
  %718 = vmatpush1.msra.mxu0 0.0
  %719 = vmatprep.subr.mxu0 0.0
  %720 = vmatpush1.msra.mxu0 0.0
  %721 = vmatprep.subr.mxu0 0.0
  %722 = vmatpush1.msra.mxu0 0.0
  %723 = vmatprep.subr.mxu0 0.0
  %724 = vmatpush1.msra.mxu0 0.0
  %725 = vmatprep.subr.mxu0 0.0
  %726 = vmatpush1.msra.mxu0 0.0
  %727 = vmatprep.subr.mxu0 0.0
  %728 = vmatpush1.msra.mxu0 0.0
  %729 = vmatprep.subr.mxu0 0.0
  %730 = vmatpush1.msra.mxu0 0.0
  %731 = vmatprep.subr.mxu0 0.0
  %732 = vmatpush1.msra.mxu0 0.0
  %733 = vmatprep.subr.mxu0 0.0
  %734 = vmatpush1.msra.mxu0 0.0
  %735 = vmatprep.subr.mxu0 0.0
  %736 = vmatpush1.msra.mxu0 0.0
  %737 = vmatprep.subr.mxu0 0.0
  %738 = vmatpush1.msra.mxu0 0.0
  %739 = vmatprep.subr.mxu0 0.0
  %740 = vmatpush1.msra.mxu0 0.0
  %741 = vmatprep.subr.mxu0 0.0
  %742 = vmatpush1.msra.mxu0 0.0
  %743 = vmatprep.subr.mxu0 0.0
  %744 = vmatpush1.msra.mxu0 0.0
  %745 = vmatprep.subr.mxu0 0.0
  %746 = vmatpush1.msra.mxu0 0.0
  %747 = vmatprep.subr.mxu0 0.0
  %748 = vmatpush1.msra.mxu0 0.0
  %749 = vmatprep.subr.mxu0 0.0
  %750 = vmatpush1.msra.mxu0 0.0
  %751 = vmatprep.mubr.f32.mxu0 0.0
  %752 = vmatmul.mubr.f32.gmra.mrb[0].mxu0 %v682
  %v753 = vpop.f32.mrb[0].mxu0
  %v754 = vadd.f32 0.0, %v753
  %v755 = vpop.f32.mrb[0].mxu0
  %v756 = vadd.f32 0.0, %v755
  %757 = vmatprep.mubr.f32.mxu0 0.0
  %758 = vmatmul.mubr.f32.gmra.mrb[0].mxu0 %v685
  %v759 = vpop.f32.mrb[0].mxu0
  %v760 = vadd.f32 0.0, %v759
  %v761 = vpop.f32.mrb[0].mxu0
  %v762 = vadd.f32 0.0, %v761
  %763 = vdwg.mxu0
  %v764 = vadd.f32 %v658, %v754
  %v765 = vadd.f32 %v659, %v756
  %v766 = vadd.f32 %v660, %v760
  %v767 = vadd.f32 %v661, %v762
  %s768 = scalar_lea.vmem %s1, 896
  %v769 = vld [vmem:[%s768] sm:$0xff]
  %v770 = vld [vmem:[%s768 + $0x8] sm:$0xff]
  %v771 = vld [vmem:[%s768 + $0x10] sm:$0xff]
  %v772 = vld [vmem:[%s768 + $0x18] sm:$0xff]
  %v773 = vld [vmem:[%s768 + $0x20] sm:$0xff]
  %v774 = vld [vmem:[%s768 + $0x28] sm:$0xff]
  %v775 = vld [vmem:[%s768 + $0x30] sm:$0xff]
  %v776 = vld [vmem:[%s768 + $0x38] sm:$0xff]
  %v777 = vld [vmem:[%s768 + $0x40] sm:$0xff]
  %v778 = vld [vmem:[%s768 + $0x48] sm:$0xff]
  %v779 = vld [vmem:[%s768 + $0x50] sm:$0xff]
  %v780 = vld [vmem:[%s768 + $0x58] sm:$0xff]
  %v781 = vld [vmem:[%s768 + $0x60] sm:$0xff]
  %v782 = vld [vmem:[%s768 + $0x68] sm:$0xff]
  %v783 = vld [vmem:[%s768 + $0x70] sm:$0xff]
  %v784 = vld [vmem:[%s768 + $0x78] sm:$0xff]
  %785 = vrot.lane.b32.xlu0 %v662, 124
  %v786 = vpop.permute.xlu0 %785
  %787 = vrot.lane.b32.xlu0 %v663, 124
  %v788 = vpop.permute.xlu0 %787
  %v789 = vsel %vm44, %v786, 0
  %v791 = vsel %vm44, %v788, 0
  %793 = vmatprep.subr.mxu0 %v770
  %794 = vmatpush1.msra.mxu0 %v769
  %795 = vmatprep.subr.mxu0 %v772
  %796 = vmatpush1.msra.mxu0 %v771
  %797 = vmatprep.subr.mxu0 %v774
  %798 = vmatpush1.msra.mxu0 %v773
  %799 = vmatprep.subr.mxu0 %v776
  %800 = vmatpush1.msra.mxu0 %v775
  %801 = vmatprep.subr.mxu0 %v778
  %802 = vmatpush1.msra.mxu0 %v777
  %803 = vmatprep.subr.mxu0 %v780
  %804 = vmatpush1.msra.mxu0 %v779
  %805 = vmatprep.subr.mxu0 %v782
  %806 = vmatpush1.msra.mxu0 %v781
  %807 = vmatprep.subr.mxu0 %v784
  %808 = vmatpush1.msra.mxu0 %v783
  %809 = vmatprep.subr.mxu0 0.0
  %810 = vmatpush1.msra.mxu0 0.0
  %811 = vmatprep.subr.mxu0 0.0
  %812 = vmatpush1.msra.mxu0 0.0
  %813 = vmatprep.subr.mxu0 0.0
  %814 = vmatpush1.msra.mxu0 0.0
  %815 = vmatprep.subr.mxu0 0.0
  %816 = vmatpush1.msra.mxu0 0.0
  %817 = vmatprep.subr.mxu0 0.0
  %818 = vmatpush1.msra.mxu0 0.0
  %819 = vmatprep.subr.mxu0 0.0
  %820 = vmatpush1.msra.mxu0 0.0
  %821 = vmatprep.subr.mxu0 0.0
  %822 = vmatpush1.msra.mxu0 0.0
  %823 = vmatprep.subr.mxu0 0.0
  %824 = vmatpush1.msra.mxu0 0.0
  %825 = vmatprep.subr.mxu0 0.0
  %826 = vmatpush1.msra.mxu0 0.0
  %827 = vmatprep.subr.mxu0 0.0
  %828 = vmatpush1.msra.mxu0 0.0
  %829 = vmatprep.subr.mxu0 0.0
  %830 = vmatpush1.msra.mxu0 0.0
  %831 = vmatprep.subr.mxu0 0.0
  %832 = vmatpush1.msra.mxu0 0.0
  %833 = vmatprep.subr.mxu0 0.0
  %834 = vmatpush1.msra.mxu0 0.0
  %835 = vmatprep.subr.mxu0 0.0
  %836 = vmatpush1.msra.mxu0 0.0
  %837 = vmatprep.subr.mxu0 0.0
  %838 = vmatpush1.msra.mxu0 0.0
  %839 = vmatprep.subr.mxu0 0.0
  %840 = vmatpush1.msra.mxu0 0.0
  %841 = vmatprep.subr.mxu0 0.0
  %842 = vmatpush1.msra.mxu0 0.0
  %843 = vmatprep.subr.mxu0 0.0
  %844 = vmatpush1.msra.mxu0 0.0
  %845 = vmatprep.subr.mxu0 0.0
  %846 = vmatpush1.msra.mxu0 0.0
  %847 = vmatprep.subr.mxu0 0.0
  %848 = vmatpush1.msra.mxu0 0.0
  %849 = vmatprep.subr.mxu0 0.0
  %850 = vmatpush1.msra.mxu0 0.0
  %851 = vmatprep.subr.mxu0 0.0
  %852 = vmatpush1.msra.mxu0 0.0
  %853 = vmatprep.subr.mxu0 0.0
  %854 = vmatpush1.msra.mxu0 0.0
  %855 = vmatprep.subr.mxu0 0.0
  %856 = vmatpush1.msra.mxu0 0.0
  %857 = vmatprep.mubr.f32.mxu0 0.0
  %858 = vmatmul.mubr.f32.gmra.mrb[0].mxu0 %v789
  %v859 = vpop.f32.mrb[0].mxu0
  %v860 = vadd.f32 0.0, %v859
  %v861 = vpop.f32.mrb[0].mxu0
  %v862 = vadd.f32 0.0, %v861
  %863 = vmatprep.mubr.f32.mxu0 0.0
  %864 = vmatmul.mubr.f32.gmra.mrb[0].mxu0 %v791
  %v865 = vpop.f32.mrb[0].mxu0
  %v866 = vadd.f32 0.0, %v865
  %v867 = vpop.f32.mrb[0].mxu0
  %v868 = vadd.f32 0.0, %v867
  %869 = vdwg.mxu0
  %v870 = vadd.f32 %v764, %v860
  %v871 = vadd.f32 %v765, %v862
  %v872 = vadd.f32 %v766, %v866
  %v873 = vadd.f32 %v767, %v868
  %s874 = scalar_lea.vmem %s1, 1024
  %v875 = vld [vmem:[%s874] sm:$0xff]
  %v876 = vld [vmem:[%s874 + $0x8] sm:$0xff]
  %v877 = vld [vmem:[%s874 + $0x10] sm:$0xff]
  %v878 = vld [vmem:[%s874 + $0x18] sm:$0xff]
  %v879 = vld [vmem:[%s874 + $0x20] sm:$0xff]
  %v880 = vld [vmem:[%s874 + $0x28] sm:$0xff]
  %v881 = vld [vmem:[%s874 + $0x30] sm:$0xff]
  %v882 = vld [vmem:[%s874 + $0x38] sm:$0xff]
  %v883 = vld [vmem:[%s874 + $0x40] sm:$0xff]
  %v884 = vld [vmem:[%s874 + $0x48] sm:$0xff]
  %v885 = vld [vmem:[%s874 + $0x50] sm:$0xff]
  %v886 = vld [vmem:[%s874 + $0x58] sm:$0xff]
  %v887 = vld [vmem:[%s874 + $0x60] sm:$0xff]
  %v888 = vld [vmem:[%s874 + $0x68] sm:$0xff]
  %v889 = vld [vmem:[%s874 + $0x70] sm:$0xff]
  %v890 = vld [vmem:[%s874 + $0x78] sm:$0xff]
  %891 = vrot.lane.b32.xlu0 %v662, 120
  %v892 = vpop.permute.xlu0 %891
  %893 = vrot.lane.b32.xlu0 %v663, 120
  %v894 = vpop.permute.xlu0 %893
  %v895 = vsel %vm44, %v892, 0
  %v897 = vsel %vm44, %v894, 0
  %899 = vmatprep.subr.mxu0 %v876
  %900 = vmatpush1.msra.mxu0 %v875
  %901 = vmatprep.subr.mxu0 %v878
  %902 = vmatpush1.msra.mxu0 %v877
  %903 = vmatprep.subr.mxu0 %v880
  %904 = vmatpush1.msra.mxu0 %v879
  %905 = vmatprep.subr.mxu0 %v882
  %906 = vmatpush1.msra.mxu0 %v881
  %907 = vmatprep.subr.mxu0 %v884
  %908 = vmatpush1.msra.mxu0 %v883
  %909 = vmatprep.subr.mxu0 %v886
  %910 = vmatpush1.msra.mxu0 %v885
  %911 = vmatprep.subr.mxu0 %v888
  %912 = vmatpush1.msra.mxu0 %v887
  %913 = vmatprep.subr.mxu0 %v890
  %914 = vmatpush1.msra.mxu0 %v889
  %915 = vmatprep.subr.mxu0 0.0
  %916 = vmatpush1.msra.mxu0 0.0
  %917 = vmatprep.subr.mxu0 0.0
  %918 = vmatpush1.msra.mxu0 0.0
  %919 = vmatprep.subr.mxu0 0.0
  %920 = vmatpush1.msra.mxu0 0.0
  %921 = vmatprep.subr.mxu0 0.0
  %922 = vmatpush1.msra.mxu0 0.0
  %923 = vmatprep.subr.mxu0 0.0
  %924 = vmatpush1.msra.mxu0 0.0
  %925 = vmatprep.subr.mxu0 0.0
  %926 = vmatpush1.msra.mxu0 0.0
  %927 = vmatprep.subr.mxu0 0.0
  %928 = vmatpush1.msra.mxu0 0.0
  %929 = vmatprep.subr.mxu0 0.0
  %930 = vmatpush1.msra.mxu0 0.0
  %931 = vmatprep.subr.mxu0 0.0
  %932 = vmatpush1.msra.mxu0 0.0
  %933 = vmatprep.subr.mxu0 0.0
  %934 = vmatpush1.msra.mxu0 0.0
  %935 = vmatprep.subr.mxu0 0.0
  %936 = vmatpush1.msra.mxu0 0.0
  %937 = vmatprep.subr.mxu0 0.0
  %938 = vmatpush1.msra.mxu0 0.0
  %939 = vmatprep.subr.mxu0 0.0
  %940 = vmatpush1.msra.mxu0 0.0
  %941 = vmatprep.subr.mxu0 0.0
  %942 = vmatpush1.msra.mxu0 0.0
  %943 = vmatprep.subr.mxu0 0.0
  %944 = vmatpush1.msra.mxu0 0.0
  %945 = vmatprep.subr.mxu0 0.0
  %946 = vmatpush1.msra.mxu0 0.0
  %947 = vmatprep.subr.mxu0 0.0
  %948 = vmatpush1.msra.mxu0 0.0
  %949 = vmatprep.subr.mxu0 0.0
  %950 = vmatpush1.msra.mxu0 0.0
  %951 = vmatprep.subr.mxu0 0.0
  %952 = vmatpush1.msra.mxu0 0.0
  %953 = vmatprep.subr.mxu0 0.0
  %954 = vmatpush1.msra.mxu0 0.0
  %955 = vmatprep.subr.mxu0 0.0
  %956 = vmatpush1.msra.mxu0 0.0
  %957 = vmatprep.subr.mxu0 0.0
  %958 = vmatpush1.msra.mxu0 0.0
  %959 = vmatprep.subr.mxu0 0.0
  %960 = vmatpush1.msra.mxu0 0.0
  %961 = vmatprep.subr.mxu0 0.0
  %962 = vmatpush1.msra.mxu0 0.0
  %963 = vmatprep.mubr.f32.mxu0 0.0
  %964 = vmatmul.mubr.f32.gmra.mrb[0].mxu0 %v895
  %v965 = vpop.f32.mrb[0].mxu0
  %v966 = vadd.f32 0.0, %v965
  %v967 = vpop.f32.mrb[0].mxu0
  %v968 = vadd.f32 0.0, %v967
  %969 = vmatprep.mubr.f32.mxu0 0.0
  %970 = vmatmul.mubr.f32.gmra.mrb[0].mxu0 %v897
  %v971 = vpop.f32.mrb[0].mxu0
  %v972 = vadd.f32 0.0, %v971
  %v973 = vpop.f32.mrb[0].mxu0
  %v974 = vadd.f32 0.0, %v973
  %975 = vdwg.mxu0
  %v976 = vadd.f32 %v870, %v966
  %v977 = vadd.f32 %v871, %v968
  %v978 = vadd.f32 %v872, %v972
  %v979 = vadd.f32 %v873, %v974
  %v980 = vmax.f32 %v976, 0.0
  %v981 = vmax.f32 %v977, 0.0
  %v982 = vmax.f32 %v978, 0.0
  %v983 = vmax.f32 %v979, 0.0
  %984 = vst [vmem:[%s3] sm:$0xff] %v980
  %985 = vst [vmem:[%s3 + $0x8] sm:$0xff] %v981
  %986 = vst [vmem:[%s3 + $0x10] sm:$0xff] %v982
  %987 = vst [vmem:[%s3 + $0x18] sm:$0xff] %v983
  %s988 = scalar_lea.vmem %s0, 24
  %v989 = vld [vmem:[%s988] sm:$0xff]
  %v990 = vld [vmem:[%s988 + $0x8] sm:$0xff]
  %v991 = vld [vmem:[%s1] sm:$0xff]
  %v992 = vld [vmem:[%s1 + $0x8] sm:$0xff]
  %v993 = vld [vmem:[%s1 + $0x10] sm:$0xff]
  %v994 = vld [vmem:[%s1 + $0x18] sm:$0xff]
  %v995 = vld [vmem:[%s1 + $0x20] sm:$0xff]
  %v996 = vld [vmem:[%s1 + $0x28] sm:$0xff]
  %v997 = vld [vmem:[%s1 + $0x30] sm:$0xff]
  %v998 = vld [vmem:[%s1 + $0x38] sm:$0xff]
  %v999 = vld [vmem:[%s1 + $0x40] sm:$0xff]
  %v1000 = vld [vmem:[%s1 + $0x48] sm:$0xff]
  %v1001 = vld [vmem:[%s1 + $0x50] sm:$0xff]
  %v1002 = vld [vmem:[%s1 + $0x58] sm:$0xff]
  %v1003 = vld [vmem:[%s1 + $0x60] sm:$0xff]
  %v1004 = vld [vmem:[%s1 + $0x68] sm:$0xff]
  %v1005 = vld [vmem:[%s1 + $0x70] sm:$0xff]
  %v1006 = vld [vmem:[%s1 + $0x78] sm:$0xff]
  %v1008 = vsel %vm44, %v989, 0
  %v1011 = vsel %vm44, %v990, 0
  %1013 = vmatprep.subr.mxu0 %v992
  %1014 = vmatpush1.msra.mxu0 %v991
  %1015 = vmatprep.subr.mxu0 %v994
  %1016 = vmatpush1.msra.mxu0 %v993
  %1017 = vmatprep.subr.mxu0 %v996
  %1018 = vmatpush1.msra.mxu0 %v995
  %1019 = vmatprep.subr.mxu0 %v998
  %1020 = vmatpush1.msra.mxu0 %v997
  %1021 = vmatprep.subr.mxu0 %v1000
  %1022 = vmatpush1.msra.mxu0 %v999
  %1023 = vmatprep.subr.mxu0 %v1002
  %1024 = vmatpush1.msra.mxu0 %v1001
  %1025 = vmatprep.subr.mxu0 %v1004
  %1026 = vmatpush1.msra.mxu0 %v1003
  %1027 = vmatprep.subr.mxu0 %v1006
  %1028 = vmatpush1.msra.mxu0 %v1005
  %1029 = vmatprep.subr.mxu0 0.0
  %1030 = vmatpush1.msra.mxu0 0.0
  %1031 = vmatprep.subr.mxu0 0.0
  %1032 = vmatpush1.msra.mxu0 0.0
  %1033 = vmatprep.subr.mxu0 0.0
  %1034 = vmatpush1.msra.mxu0 0.0
  %1035 = vmatprep.subr.mxu0 0.0
  %1036 = vmatpush1.msra.mxu0 0.0
  %1037 = vmatprep.subr.mxu0 0.0
  %1038 = vmatpush1.msra.mxu0 0.0
  %1039 = vmatprep.subr.mxu0 0.0
  %1040 = vmatpush1.msra.mxu0 0.0
  %1041 = vmatprep.subr.mxu0 0.0
  %1042 = vmatpush1.msra.mxu0 0.0
  %1043 = vmatprep.subr.mxu0 0.0
  %1044 = vmatpush1.msra.mxu0 0.0
  %1045 = vmatprep.subr.mxu0 0.0
  %1046 = vmatpush1.msra.mxu0 0.0
  %1047 = vmatprep.subr.mxu0 0.0
  %1048 = vmatpush1.msra.mxu0 0.0
  %1049 = vmatprep.subr.mxu0 0.0
  %1050 = vmatpush1.msra.mxu0 0.0
  %1051 = vmatprep.subr.mxu0 0.0
  %1052 = vmatpush1.msra.mxu0 0.0
  %1053 = vmatprep.subr.mxu0 0.0
  %1054 = vmatpush1.msra.mxu0 0.0
  %1055 = vmatprep.subr.mxu0 0.0
  %1056 = vmatpush1.msra.mxu0 0.0
  %1057 = vmatprep.subr.mxu0 0.0
  %1058 = vmatpush1.msra.mxu0 0.0
  %1059 = vmatprep.subr.mxu0 0.0
  %1060 = vmatpush1.msra.mxu0 0.0
  %1061 = vmatprep.subr.mxu0 0.0
  %1062 = vmatpush1.msra.mxu0 0.0
  %1063 = vmatprep.subr.mxu0 0.0
  %1064 = vmatpush1.msra.mxu0 0.0
  %1065 = vmatprep.subr.mxu0 0.0
  %1066 = vmatpush1.msra.mxu0 0.0
  %1067 = vmatprep.subr.mxu0 0.0
  %1068 = vmatpush1.msra.mxu0 0.0
  %1069 = vmatprep.subr.mxu0 0.0
  %1070 = vmatpush1.msra.mxu0 0.0
  %1071 = vmatprep.subr.mxu0 0.0
  %1072 = vmatpush1.msra.mxu0 0.0
  %1073 = vmatprep.subr.mxu0 0.0
  %1074 = vmatpush1.msra.mxu0 0.0
  %1075 = vmatprep.subr.mxu0 0.0
  %1076 = vmatpush1.msra.mxu0 0.0
  %1077 = vmatprep.mubr.f32.mxu0 0.0
  %1078 = vmatmul.mubr.f32.gmra.mrb[0].mxu0 %v1008
  %v1079 = vpop.f32.mrb[0].mxu0
  %v1080 = vadd.f32 0.0, %v1079
  %v1081 = vpop.f32.mrb[0].mxu0
  %v1082 = vadd.f32 0.0, %v1081
  %1083 = vmatprep.mubr.f32.mxu0 0.0
  %1084 = vmatmul.mubr.f32.gmra.mrb[0].mxu0 %v1011
  %v1085 = vpop.f32.mrb[0].mxu0
  %v1086 = vadd.f32 0.0, %v1085
  %v1087 = vpop.f32.mrb[0].mxu0
  %v1088 = vadd.f32 0.0, %v1087
  %1089 = vdwg.mxu0
  %v1090 = vadd.f32 %v19, %v1080
  %v1091 = vadd.f32 %v23, %v1082
  %v1092 = vadd.f32 %v19, %v1086
  %v1093 = vadd.f32 %v23, %v1088
  %v1094 = vld [vmem:[%s132] sm:$0xff]
  %v1095 = vld [vmem:[%s132 + $0x8] sm:$0xff]
  %v1096 = vld [vmem:[%s132 + $0x10] sm:$0xff]
  %v1097 = vld [vmem:[%s132 + $0x18] sm:$0xff]
  %v1098 = vld [vmem:[%s132 + $0x20] sm:$0xff]
  %v1099 = vld [vmem:[%s132 + $0x28] sm:$0xff]
  %v1100 = vld [vmem:[%s132 + $0x30] sm:$0xff]
  %v1101 = vld [vmem:[%s132 + $0x38] sm:$0xff]
  %v1102 = vld [vmem:[%s132 + $0x40] sm:$0xff]
  %v1103 = vld [vmem:[%s132 + $0x48] sm:$0xff]
  %v1104 = vld [vmem:[%s132 + $0x50] sm:$0xff]
  %v1105 = vld [vmem:[%s132 + $0x58] sm:$0xff]
  %v1106 = vld [vmem:[%s132 + $0x60] sm:$0xff]
  %v1107 = vld [vmem:[%s132 + $0x68] sm:$0xff]
  %v1108 = vld [vmem:[%s132 + $0x70] sm:$0xff]
  %v1109 = vld [vmem:[%s132 + $0x78] sm:$0xff]
  %1110 = vrot.lane.b32.xlu0 %v989, 124
  %v1111 = vpop.permute.xlu0 %1110
  %1112 = vrot.lane.b32.xlu0 %v990, 124
  %v1113 = vpop.permute.xlu0 %1112
  %v1114 = vsel %vm44, %v1111, 0
  %v1116 = vsel %vm44, %v1113, 0
  %1118 = vmatprep.subr.mxu0 %v1095
  %1119 = vmatpush1.msra.mxu0 %v1094
  %1120 = vmatprep.subr.mxu0 %v1097
  %1121 = vmatpush1.msra.mxu0 %v1096
  %1122 = vmatprep.subr.mxu0 %v1099
  %1123 = vmatpush1.msra.mxu0 %v1098
  %1124 = vmatprep.subr.mxu0 %v1101
  %1125 = vmatpush1.msra.mxu0 %v1100
  %1126 = vmatprep.subr.mxu0 %v1103
  %1127 = vmatpush1.msra.mxu0 %v1102
  %1128 = vmatprep.subr.mxu0 %v1105
  %1129 = vmatpush1.msra.mxu0 %v1104
  %1130 = vmatprep.subr.mxu0 %v1107
  %1131 = vmatpush1.msra.mxu0 %v1106
  %1132 = vmatprep.subr.mxu0 %v1109
  %1133 = vmatpush1.msra.mxu0 %v1108
  %1134 = vmatprep.subr.mxu0 0.0
  %1135 = vmatpush1.msra.mxu0 0.0
  %1136 = vmatprep.subr.mxu0 0.0
  %1137 = vmatpush1.msra.mxu0 0.0
  %1138 = vmatprep.subr.mxu0 0.0
  %1139 = vmatpush1.msra.mxu0 0.0
  %1140 = vmatprep.subr.mxu0 0.0
  %1141 = vmatpush1.msra.mxu0 0.0
  %1142 = vmatprep.subr.mxu0 0.0
  %1143 = vmatpush1.msra.mxu0 0.0
  %1144 = vmatprep.subr.mxu0 0.0
  %1145 = vmatpush1.msra.mxu0 0.0
  %1146 = vmatprep.subr.mxu0 0.0
  %1147 = vmatpush1.msra.mxu0 0.0
  %1148 = vmatprep.subr.mxu0 0.0
  %1149 = vmatpush1.msra.mxu0 0.0
  %1150 = vmatprep.subr.mxu0 0.0
  %1151 = vmatpush1.msra.mxu0 0.0
  %1152 = vmatprep.subr.mxu0 0.0
  %1153 = vmatpush1.msra.mxu0 0.0
  %1154 = vmatprep.subr.mxu0 0.0
  %1155 = vmatpush1.msra.mxu0 0.0
  %1156 = vmatprep.subr.mxu0 0.0
  %1157 = vmatpush1.msra.mxu0 0.0
  %1158 = vmatprep.subr.mxu0 0.0
  %1159 = vmatpush1.msra.mxu0 0.0
  %1160 = vmatprep.subr.mxu0 0.0
  %1161 = vmatpush1.msra.mxu0 0.0
  %1162 = vmatprep.subr.mxu0 0.0
  %1163 = vmatpush1.msra.mxu0 0.0
  %1164 = vmatprep.subr.mxu0 0.0
  %1165 = vmatpush1.msra.mxu0 0.0
  %1166 = vmatprep.subr.mxu0 0.0
  %1167 = vmatpush1.msra.mxu0 0.0
  %1168 = vmatprep.subr.mxu0 0.0
  %1169 = vmatpush1.msra.mxu0 0.0
  %1170 = vmatprep.subr.mxu0 0.0
  %1171 = vmatpush1.msra.mxu0 0.0
  %1172 = vmatprep.subr.mxu0 0.0
  %1173 = vmatpush1.msra.mxu0 0.0
  %1174 = vmatprep.subr.mxu0 0.0
  %1175 = vmatpush1.msra.mxu0 0.0
  %1176 = vmatprep.subr.mxu0 0.0
  %1177 = vmatpush1.msra.mxu0 0.0
  %1178 = vmatprep.subr.mxu0 0.0
  %1179 = vmatpush1.msra.mxu0 0.0
  %1180 = vmatprep.subr.mxu0 0.0
  %1181 = vmatpush1.msra.mxu0 0.0
  %1182 = vmatprep.mubr.f32.mxu0 0.0
  %1183 = vmatmul.mubr.f32.gmra.mrb[0].mxu0 %v1114
  %v1184 = vpop.f32.mrb[0].mxu0
  %v1185 = vadd.f32 0.0, %v1184
  %v1186 = vpop.f32.mrb[0].mxu0
  %v1187 = vadd.f32 0.0, %v1186
  %1188 = vmatprep.mubr.f32.mxu0 0.0
  %1189 = vmatmul.mubr.f32.gmra.mrb[0].mxu0 %v1116
  %v1190 = vpop.f32.mrb[0].mxu0
  %v1191 = vadd.f32 0.0, %v1190
  %v1192 = vpop.f32.mrb[0].mxu0
  %v1193 = vadd.f32 0.0, %v1192
  %1194 = vdwg.mxu0
  %v1195 = vadd.f32 %v1090, %v1185
  %v1196 = vadd.f32 %v1091, %v1187
  %v1197 = vadd.f32 %v1092, %v1191
  %v1198 = vadd.f32 %v1093, %v1193
  %v1199 = vld [vmem:[%s238] sm:$0xff]
  %v1200 = vld [vmem:[%s238 + $0x8] sm:$0xff]
  %v1201 = vld [vmem:[%s238 + $0x10] sm:$0xff]
  %v1202 = vld [vmem:[%s238 + $0x18] sm:$0xff]
  %v1203 = vld [vmem:[%s238 + $0x20] sm:$0xff]
  %v1204 = vld [vmem:[%s238 + $0x28] sm:$0xff]
  %v1205 = vld [vmem:[%s238 + $0x30] sm:$0xff]
  %v1206 = vld [vmem:[%s238 + $0x38] sm:$0xff]
  %v1207 = vld [vmem:[%s238 + $0x40] sm:$0xff]
  %v1208 = vld [vmem:[%s238 + $0x48] sm:$0xff]
  %v1209 = vld [vmem:[%s238 + $0x50] sm:$0xff]
  %v1210 = vld [vmem:[%s238 + $0x58] sm:$0xff]
  %v1211 = vld [vmem:[%s238 + $0x60] sm:$0xff]
  %v1212 = vld [vmem:[%s238 + $0x68] sm:$0xff]
  %v1213 = vld [vmem:[%s238 + $0x70] sm:$0xff]
  %v1214 = vld [vmem:[%s238 + $0x78] sm:$0xff]
  %1215 = vrot.lane.b32.xlu0 %v989, 120
  %v1216 = vpop.permute.xlu0 %1215
  %1217 = vrot.lane.b32.xlu0 %v990, 120
  %v1218 = vpop.permute.xlu0 %1217
  %v1219 = vsel %vm44, %v1216, 0
  %v1221 = vsel %vm44, %v1218, 0
  %1223 = vmatprep.subr.mxu0 %v1200
  %1224 = vmatpush1.msra.mxu0 %v1199
  %1225 = vmatprep.subr.mxu0 %v1202
  %1226 = vmatpush1.msra.mxu0 %v1201
  %1227 = vmatprep.subr.mxu0 %v1204
  %1228 = vmatpush1.msra.mxu0 %v1203
  %1229 = vmatprep.subr.mxu0 %v1206
  %1230 = vmatpush1.msra.mxu0 %v1205
  %1231 = vmatprep.subr.mxu0 %v1208
  %1232 = vmatpush1.msra.mxu0 %v1207
  %1233 = vmatprep.subr.mxu0 %v1210
  %1234 = vmatpush1.msra.mxu0 %v1209
  %1235 = vmatprep.subr.mxu0 %v1212
  %1236 = vmatpush1.msra.mxu0 %v1211
  %1237 = vmatprep.subr.mxu0 %v1214
  %1238 = vmatpush1.msra.mxu0 %v1213
  %1239 = vmatprep.subr.mxu0 0.0
  %1240 = vmatpush1.msra.mxu0 0.0
  %1241 = vmatprep.subr.mxu0 0.0
  %1242 = vmatpush1.msra.mxu0 0.0
  %1243 = vmatprep.subr.mxu0 0.0
  %1244 = vmatpush1.msra.mxu0 0.0
  %1245 = vmatprep.subr.mxu0 0.0
  %1246 = vmatpush1.msra.mxu0 0.0
  %1247 = vmatprep.subr.mxu0 0.0
  %1248 = vmatpush1.msra.mxu0 0.0
  %1249 = vmatprep.subr.mxu0 0.0
  %1250 = vmatpush1.msra.mxu0 0.0
  %1251 = vmatprep.subr.mxu0 0.0
  %1252 = vmatpush1.msra.mxu0 0.0
  %1253 = vmatprep.subr.mxu0 0.0
  %1254 = vmatpush1.msra.mxu0 0.0
  %1255 = vmatprep.subr.mxu0 0.0
  %1256 = vmatpush1.msra.mxu0 0.0
  %1257 = vmatprep.subr.mxu0 0.0
  %1258 = vmatpush1.msra.mxu0 0.0
  %1259 = vmatprep.subr.mxu0 0.0
  %1260 = vmatpush1.msra.mxu0 0.0
  %1261 = vmatprep.subr.mxu0 0.0
  %1262 = vmatpush1.msra.mxu0 0.0
  %1263 = vmatprep.subr.mxu0 0.0
  %1264 = vmatpush1.msra.mxu0 0.0
  %1265 = vmatprep.subr.mxu0 0.0
  %1266 = vmatpush1.msra.mxu0 0.0
  %1267 = vmatprep.subr.mxu0 0.0
  %1268 = vmatpush1.msra.mxu0 0.0
  %1269 = vmatprep.subr.mxu0 0.0
  %1270 = vmatpush1.msra.mxu0 0.0
  %1271 = vmatprep.subr.mxu0 0.0
  %1272 = vmatpush1.msra.mxu0 0.0
  %1273 = vmatprep.subr.mxu0 0.0
  %1274 = vmatpush1.msra.mxu0 0.0
  %1275 = vmatprep.subr.mxu0 0.0
  %1276 = vmatpush1.msra.mxu0 0.0
  %1277 = vmatprep.subr.mxu0 0.0
  %1278 = vmatpush1.msra.mxu0 0.0
  %1279 = vmatprep.subr.mxu0 0.0
  %1280 = vmatpush1.msra.mxu0 0.0
  %1281 = vmatprep.subr.mxu0 0.0
  %1282 = vmatpush1.msra.mxu0 0.0
  %1283 = vmatprep.subr.mxu0 0.0
  %1284 = vmatpush1.msra.mxu0 0.0
  %1285 = vmatprep.subr.mxu0 0.0
  %1286 = vmatpush1.msra.mxu0 0.0
  %1287 = vmatprep.mubr.f32.mxu0 0.0
  %1288 = vmatmul.mubr.f32.gmra.mrb[0].mxu0 %v1219
  %v1289 = vpop.f32.mrb[0].mxu0
  %v1290 = vadd.f32 0.0, %v1289
  %v1291 = vpop.f32.mrb[0].mxu0
  %v1292 = vadd.f32 0.0, %v1291
  %1293 = vmatprep.mubr.f32.mxu0 0.0
  %1294 = vmatmul.mubr.f32.gmra.mrb[0].mxu0 %v1221
  %v1295 = vpop.f32.mrb[0].mxu0
  %v1296 = vadd.f32 0.0, %v1295
  %v1297 = vpop.f32.mrb[0].mxu0
  %v1298 = vadd.f32 0.0, %v1297
  %1299 = vdwg.mxu0
  %v1300 = vadd.f32 %v1195, %v1290
  %v1301 = vadd.f32 %v1196, %v1292
  %v1302 = vadd.f32 %v1197, %v1296
  %v1303 = vadd.f32 %v1198, %v1298
  %v1304 = vld [vmem:[%s988 + $0x1] sm:$0xff]
  %v1305 = vld [vmem:[%s988 + $0x9] sm:$0xff]
  %v1306 = vld [vmem:[%s346] sm:$0xff]
  %v1307 = vld [vmem:[%s346 + $0x8] sm:$0xff]
  %v1308 = vld [vmem:[%s346 + $0x10] sm:$0xff]
  %v1309 = vld [vmem:[%s346 + $0x18] sm:$0xff]
  %v1310 = vld [vmem:[%s346 + $0x20] sm:$0xff]
  %v1311 = vld [vmem:[%s346 + $0x28] sm:$0xff]
  %v1312 = vld [vmem:[%s346 + $0x30] sm:$0xff]
  %v1313 = vld [vmem:[%s346 + $0x38] sm:$0xff]
  %v1314 = vld [vmem:[%s346 + $0x40] sm:$0xff]
  %v1315 = vld [vmem:[%s346 + $0x48] sm:$0xff]
  %v1316 = vld [vmem:[%s346 + $0x50] sm:$0xff]
  %v1317 = vld [vmem:[%s346 + $0x58] sm:$0xff]
  %v1318 = vld [vmem:[%s346 + $0x60] sm:$0xff]
  %v1319 = vld [vmem:[%s346 + $0x68] sm:$0xff]
  %v1320 = vld [vmem:[%s346 + $0x70] sm:$0xff]
  %v1321 = vld [vmem:[%s346 + $0x78] sm:$0xff]
  %v1323 = vsel %vm44, %v1304, 0
  %v1326 = vsel %vm44, %v1305, 0
  %1328 = vmatprep.subr.mxu0 %v1307
  %1329 = vmatpush1.msra.mxu0 %v1306
  %1330 = vmatprep.subr.mxu0 %v1309
  %1331 = vmatpush1.msra.mxu0 %v1308
  %1332 = vmatprep.subr.mxu0 %v1311
  %1333 = vmatpush1.msra.mxu0 %v1310
  %1334 = vmatprep.subr.mxu0 %v1313
  %1335 = vmatpush1.msra.mxu0 %v1312
  %1336 = vmatprep.subr.mxu0 %v1315
  %1337 = vmatpush1.msra.mxu0 %v1314
  %1338 = vmatprep.subr.mxu0 %v1317
  %1339 = vmatpush1.msra.mxu0 %v1316
  %1340 = vmatprep.subr.mxu0 %v1319
  %1341 = vmatpush1.msra.mxu0 %v1318
  %1342 = vmatprep.subr.mxu0 %v1321
  %1343 = vmatpush1.msra.mxu0 %v1320
  %1344 = vmatprep.subr.mxu0 0.0
  %1345 = vmatpush1.msra.mxu0 0.0
  %1346 = vmatprep.subr.mxu0 0.0
  %1347 = vmatpush1.msra.mxu0 0.0
  %1348 = vmatprep.subr.mxu0 0.0
  %1349 = vmatpush1.msra.mxu0 0.0
  %1350 = vmatprep.subr.mxu0 0.0
  %1351 = vmatpush1.msra.mxu0 0.0
  %1352 = vmatprep.subr.mxu0 0.0
  %1353 = vmatpush1.msra.mxu0 0.0
  %1354 = vmatprep.subr.mxu0 0.0
  %1355 = vmatpush1.msra.mxu0 0.0
  %1356 = vmatprep.subr.mxu0 0.0
  %1357 = vmatpush1.msra.mxu0 0.0
  %1358 = vmatprep.subr.mxu0 0.0
  %1359 = vmatpush1.msra.mxu0 0.0
  %1360 = vmatprep.subr.mxu0 0.0
  %1361 = vmatpush1.msra.mxu0 0.0
  %1362 = vmatprep.subr.mxu0 0.0
  %1363 = vmatpush1.msra.mxu0 0.0
  %1364 = vmatprep.subr.mxu0 0.0
  %1365 = vmatpush1.msra.mxu0 0.0
  %1366 = vmatprep.subr.mxu0 0.0
  %1367 = vmatpush1.msra.mxu0 0.0
  %1368 = vmatprep.subr.mxu0 0.0
  %1369 = vmatpush1.msra.mxu0 0.0
  %1370 = vmatprep.subr.mxu0 0.0
  %1371 = vmatpush1.msra.mxu0 0.0
  %1372 = vmatprep.subr.mxu0 0.0
  %1373 = vmatpush1.msra.mxu0 0.0
  %1374 = vmatprep.subr.mxu0 0.0
  %1375 = vmatpush1.msra.mxu0 0.0
  %1376 = vmatprep.subr.mxu0 0.0
  %1377 = vmatpush1.msra.mxu0 0.0
  %1378 = vmatprep.subr.mxu0 0.0
  %1379 = vmatpush1.msra.mxu0 0.0
  %1380 = vmatprep.subr.mxu0 0.0
  %1381 = vmatpush1.msra.mxu0 0.0
  %1382 = vmatprep.subr.mxu0 0.0
  %1383 = vmatpush1.msra.mxu0 0.0
  %1384 = vmatprep.subr.mxu0 0.0
  %1385 = vmatpush1.msra.mxu0 0.0
  %1386 = vmatprep.subr.mxu0 0.0
  %1387 = vmatpush1.msra.mxu0 0.0
  %1388 = vmatprep.subr.mxu0 0.0
  %1389 = vmatpush1.msra.mxu0 0.0
  %1390 = vmatprep.subr.mxu0 0.0
  %1391 = vmatpush1.msra.mxu0 0.0
  %1392 = vmatprep.mubr.f32.mxu0 0.0
  %1393 = vmatmul.mubr.f32.gmra.mrb[0].mxu0 %v1323
  %v1394 = vpop.f32.mrb[0].mxu0
  %v1395 = vadd.f32 0.0, %v1394
  %v1396 = vpop.f32.mrb[0].mxu0
  %v1397 = vadd.f32 0.0, %v1396
  %1398 = vmatprep.mubr.f32.mxu0 0.0
  %1399 = vmatmul.mubr.f32.gmra.mrb[0].mxu0 %v1326
  %v1400 = vpop.f32.mrb[0].mxu0
  %v1401 = vadd.f32 0.0, %v1400
  %v1402 = vpop.f32.mrb[0].mxu0
  %v1403 = vadd.f32 0.0, %v1402
  %1404 = vdwg.mxu0
  %v1405 = vadd.f32 %v1300, %v1395
  %v1406 = vadd.f32 %v1301, %v1397
  %v1407 = vadd.f32 %v1302, %v1401
  %v1408 = vadd.f32 %v1303, %v1403
  %v1409 = vld [vmem:[%s450] sm:$0xff]
  %v1410 = vld [vmem:[%s450 + $0x8] sm:$0xff]
  %v1411 = vld [vmem:[%s450 + $0x10] sm:$0xff]
  %v1412 = vld [vmem:[%s450 + $0x18] sm:$0xff]
  %v1413 = vld [vmem:[%s450 + $0x20] sm:$0xff]
  %v1414 = vld [vmem:[%s450 + $0x28] sm:$0xff]
  %v1415 = vld [vmem:[%s450 + $0x30] sm:$0xff]
  %v1416 = vld [vmem:[%s450 + $0x38] sm:$0xff]
  %v1417 = vld [vmem:[%s450 + $0x40] sm:$0xff]
  %v1418 = vld [vmem:[%s450 + $0x48] sm:$0xff]
  %v1419 = vld [vmem:[%s450 + $0x50] sm:$0xff]
  %v1420 = vld [vmem:[%s450 + $0x58] sm:$0xff]
  %v1421 = vld [vmem:[%s450 + $0x60] sm:$0xff]
  %v1422 = vld [vmem:[%s450 + $0x68] sm:$0xff]
  %v1423 = vld [vmem:[%s450 + $0x70] sm:$0xff]
  %v1424 = vld [vmem:[%s450 + $0x78] sm:$0xff]
  %1425 = vrot.lane.b32.xlu0 %v1304, 124
  %v1426 = vpop.permute.xlu0 %1425
  %1427 = vrot.lane.b32.xlu0 %v1305, 124
  %v1428 = vpop.permute.xlu0 %1427
  %v1429 = vsel %vm44, %v1426, 0
  %v1431 = vsel %vm44, %v1428, 0
  %1433 = vmatprep.subr.mxu0 %v1410
  %1434 = vmatpush1.msra.mxu0 %v1409
  %1435 = vmatprep.subr.mxu0 %v1412
  %1436 = vmatpush1.msra.mxu0 %v1411
  %1437 = vmatprep.subr.mxu0 %v1414
  %1438 = vmatpush1.msra.mxu0 %v1413
  %1439 = vmatprep.subr.mxu0 %v1416
  %1440 = vmatpush1.msra.mxu0 %v1415
  %1441 = vmatprep.subr.mxu0 %v1418
  %1442 = vmatpush1.msra.mxu0 %v1417
  %1443 = vmatprep.subr.mxu0 %v1420
  %1444 = vmatpush1.msra.mxu0 %v1419
  %1445 = vmatprep.subr.mxu0 %v1422
  %1446 = vmatpush1.msra.mxu0 %v1421
  %1447 = vmatprep.subr.mxu0 %v1424
  %1448 = vmatpush1.msra.mxu0 %v1423
  %1449 = vmatprep.subr.mxu0 0.0
  %1450 = vmatpush1.msra.mxu0 0.0
  %1451 = vmatprep.subr.mxu0 0.0
  %1452 = vmatpush1.msra.mxu0 0.0
  %1453 = vmatprep.subr.mxu0 0.0
  %1454 = vmatpush1.msra.mxu0 0.0
  %1455 = vmatprep.subr.mxu0 0.0
  %1456 = vmatpush1.msra.mxu0 0.0
  %1457 = vmatprep.subr.mxu0 0.0
  %1458 = vmatpush1.msra.mxu0 0.0
  %1459 = vmatprep.subr.mxu0 0.0
  %1460 = vmatpush1.msra.mxu0 0.0
  %1461 = vmatprep.subr.mxu0 0.0
  %1462 = vmatpush1.msra.mxu0 0.0
  %1463 = vmatprep.subr.mxu0 0.0
  %1464 = vmatpush1.msra.mxu0 0.0
  %1465 = vmatprep.subr.mxu0 0.0
  %1466 = vmatpush1.msra.mxu0 0.0
  %1467 = vmatprep.subr.mxu0 0.0
  %1468 = vmatpush1.msra.mxu0 0.0
  %1469 = vmatprep.subr.mxu0 0.0
  %1470 = vmatpush1.msra.mxu0 0.0
  %1471 = vmatprep.subr.mxu0 0.0
  %1472 = vmatpush1.msra.mxu0 0.0
  %1473 = vmatprep.subr.mxu0 0.0
  %1474 = vmatpush1.msra.mxu0 0.0
  %1475 = vmatprep.subr.mxu0 0.0
  %1476 = vmatpush1.msra.mxu0 0.0
  %1477 = vmatprep.subr.mxu0 0.0
  %1478 = vmatpush1.msra.mxu0 0.0
  %1479 = vmatprep.subr.mxu0 0.0
  %1480 = vmatpush1.msra.mxu0 0.0
  %1481 = vmatprep.subr.mxu0 0.0
  %1482 = vmatpush1.msra.mxu0 0.0
  %1483 = vmatprep.subr.mxu0 0.0
  %1484 = vmatpush1.msra.mxu0 0.0
  %1485 = vmatprep.subr.mxu0 0.0
  %1486 = vmatpush1.msra.mxu0 0.0
  %1487 = vmatprep.subr.mxu0 0.0
  %1488 = vmatpush1.msra.mxu0 0.0
  %1489 = vmatprep.subr.mxu0 0.0
  %1490 = vmatpush1.msra.mxu0 0.0
  %1491 = vmatprep.subr.mxu0 0.0
  %1492 = vmatpush1.msra.mxu0 0.0
  %1493 = vmatprep.subr.mxu0 0.0
  %1494 = vmatpush1.msra.mxu0 0.0
  %1495 = vmatprep.subr.mxu0 0.0
  %1496 = vmatpush1.msra.mxu0 0.0
  %1497 = vmatprep.mubr.f32.mxu0 0.0
  %1498 = vmatmul.mubr.f32.gmra.mrb[0].mxu0 %v1429
  %v1499 = vpop.f32.mrb[0].mxu0
  %v1500 = vadd.f32 0.0, %v1499
  %v1501 = vpop.f32.mrb[0].mxu0
  %v1502 = vadd.f32 0.0, %v1501
  %1503 = vmatprep.mubr.f32.mxu0 0.0
  %1504 = vmatmul.mubr.f32.gmra.mrb[0].mxu0 %v1431
  %v1505 = vpop.f32.mrb[0].mxu0
  %v1506 = vadd.f32 0.0, %v1505
  %v1507 = vpop.f32.mrb[0].mxu0
  %v1508 = vadd.f32 0.0, %v1507
  %1509 = vdwg.mxu0
  %v1510 = vadd.f32 %v1405, %v1500
  %v1511 = vadd.f32 %v1406, %v1502
  %v1512 = vadd.f32 %v1407, %v1506
  %v1513 = vadd.f32 %v1408, %v1508
  %v1514 = vld [vmem:[%s556] sm:$0xff]
  %v1515 = vld [vmem:[%s556 + $0x8] sm:$0xff]
  %v1516 = vld [vmem:[%s556 + $0x10] sm:$0xff]
  %v1517 = vld [vmem:[%s556 + $0x18] sm:$0xff]
  %v1518 = vld [vmem:[%s556 + $0x20] sm:$0xff]
  %v1519 = vld [vmem:[%s556 + $0x28] sm:$0xff]
  %v1520 = vld [vmem:[%s556 + $0x30] sm:$0xff]
  %v1521 = vld [vmem:[%s556 + $0x38] sm:$0xff]
  %v1522 = vld [vmem:[%s556 + $0x40] sm:$0xff]
  %v1523 = vld [vmem:[%s556 + $0x48] sm:$0xff]
  %v1524 = vld [vmem:[%s556 + $0x50] sm:$0xff]
  %v1525 = vld [vmem:[%s556 + $0x58] sm:$0xff]
  %v1526 = vld [vmem:[%s556 + $0x60] sm:$0xff]
  %v1527 = vld [vmem:[%s556 + $0x68] sm:$0xff]
  %v1528 = vld [vmem:[%s556 + $0x70] sm:$0xff]
  %v1529 = vld [vmem:[%s556 + $0x78] sm:$0xff]
  %1530 = vrot.lane.b32.xlu0 %v1304, 120
  %v1531 = vpop.permute.xlu0 %1530
  %1532 = vrot.lane.b32.xlu0 %v1305, 120
  %v1533 = vpop.permute.xlu0 %1532
  %v1534 = vsel %vm44, %v1531, 0
  %v1536 = vsel %vm44, %v1533, 0
  %1538 = vmatprep.subr.mxu0 %v1515
  %1539 = vmatpush1.msra.mxu0 %v1514
  %1540 = vmatprep.subr.mxu0 %v1517
  %1541 = vmatpush1.msra.mxu0 %v1516
  %1542 = vmatprep.subr.mxu0 %v1519
  %1543 = vmatpush1.msra.mxu0 %v1518
  %1544 = vmatprep.subr.mxu0 %v1521
  %1545 = vmatpush1.msra.mxu0 %v1520
  %1546 = vmatprep.subr.mxu0 %v1523
  %1547 = vmatpush1.msra.mxu0 %v1522
  %1548 = vmatprep.subr.mxu0 %v1525
  %1549 = vmatpush1.msra.mxu0 %v1524
  %1550 = vmatprep.subr.mxu0 %v1527
  %1551 = vmatpush1.msra.mxu0 %v1526
  %1552 = vmatprep.subr.mxu0 %v1529
  %1553 = vmatpush1.msra.mxu0 %v1528
  %1554 = vmatprep.subr.mxu0 0.0
  %1555 = vmatpush1.msra.mxu0 0.0
  %1556 = vmatprep.subr.mxu0 0.0
  %1557 = vmatpush1.msra.mxu0 0.0
  %1558 = vmatprep.subr.mxu0 0.0
  %1559 = vmatpush1.msra.mxu0 0.0
  %1560 = vmatprep.subr.mxu0 0.0
  %1561 = vmatpush1.msra.mxu0 0.0
  %1562 = vmatprep.subr.mxu0 0.0
  %1563 = vmatpush1.msra.mxu0 0.0
  %1564 = vmatprep.subr.mxu0 0.0
  %1565 = vmatpush1.msra.mxu0 0.0
  %1566 = vmatprep.subr.mxu0 0.0
  %1567 = vmatpush1.msra.mxu0 0.0
  %1568 = vmatprep.subr.mxu0 0.0
  %1569 = vmatpush1.msra.mxu0 0.0
  %1570 = vmatprep.subr.mxu0 0.0
  %1571 = vmatpush1.msra.mxu0 0.0
  %1572 = vmatprep.subr.mxu0 0.0
  %1573 = vmatpush1.msra.mxu0 0.0
  %1574 = vmatprep.subr.mxu0 0.0
  %1575 = vmatpush1.msra.mxu0 0.0
  %1576 = vmatprep.subr.mxu0 0.0
  %1577 = vmatpush1.msra.mxu0 0.0
  %1578 = vmatprep.subr.mxu0 0.0
  %1579 = vmatpush1.msra.mxu0 0.0
  %1580 = vmatprep.subr.mxu0 0.0
  %1581 = vmatpush1.msra.mxu0 0.0
  %1582 = vmatprep.subr.mxu0 0.0
  %1583 = vmatpush1.msra.mxu0 0.0
  %1584 = vmatprep.subr.mxu0 0.0
  %1585 = vmatpush1.msra.mxu0 0.0
  %1586 = vmatprep.subr.mxu0 0.0
  %1587 = vmatpush1.msra.mxu0 0.0
  %1588 = vmatprep.subr.mxu0 0.0
  %1589 = vmatpush1.msra.mxu0 0.0
  %1590 = vmatprep.subr.mxu0 0.0
  %1591 = vmatpush1.msra.mxu0 0.0
  %1592 = vmatprep.subr.mxu0 0.0
  %1593 = vmatpush1.msra.mxu0 0.0
  %1594 = vmatprep.subr.mxu0 0.0
  %1595 = vmatpush1.msra.mxu0 0.0
  %1596 = vmatprep.subr.mxu0 0.0
  %1597 = vmatpush1.msra.mxu0 0.0
  %1598 = vmatprep.subr.mxu0 0.0
  %1599 = vmatpush1.msra.mxu0 0.0
  %1600 = vmatprep.subr.mxu0 0.0
  %1601 = vmatpush1.msra.mxu0 0.0
  %1602 = vmatprep.mubr.f32.mxu0 0.0
  %1603 = vmatmul.mubr.f32.gmra.mrb[0].mxu0 %v1534
  %v1604 = vpop.f32.mrb[0].mxu0
  %v1605 = vadd.f32 0.0, %v1604
  %v1606 = vpop.f32.mrb[0].mxu0
  %v1607 = vadd.f32 0.0, %v1606
  %1608 = vmatprep.mubr.f32.mxu0 0.0
  %1609 = vmatmul.mubr.f32.gmra.mrb[0].mxu0 %v1536
  %v1610 = vpop.f32.mrb[0].mxu0
  %v1611 = vadd.f32 0.0, %v1610
  %v1612 = vpop.f32.mrb[0].mxu0
  %v1613 = vadd.f32 0.0, %v1612
  %1614 = vdwg.mxu0
  %v1615 = vadd.f32 %v1510, %v1605
  %v1616 = vadd.f32 %v1511, %v1607
  %v1617 = vadd.f32 %v1512, %v1611
  %v1618 = vadd.f32 %v1513, %v1613
  %v1619 = vld [vmem:[%s988 + $0x2] sm:$0xff]
  %v1620 = vld [vmem:[%s988 + $0xa] sm:$0xff]
  %v1621 = vld [vmem:[%s664] sm:$0xff]
  %v1622 = vld [vmem:[%s664 + $0x8] sm:$0xff]
  %v1623 = vld [vmem:[%s664 + $0x10] sm:$0xff]
  %v1624 = vld [vmem:[%s664 + $0x18] sm:$0xff]
  %v1625 = vld [vmem:[%s664 + $0x20] sm:$0xff]
  %v1626 = vld [vmem:[%s664 + $0x28] sm:$0xff]
  %v1627 = vld [vmem:[%s664 + $0x30] sm:$0xff]
  %v1628 = vld [vmem:[%s664 + $0x38] sm:$0xff]
  %v1629 = vld [vmem:[%s664 + $0x40] sm:$0xff]
  %v1630 = vld [vmem:[%s664 + $0x48] sm:$0xff]
  %v1631 = vld [vmem:[%s664 + $0x50] sm:$0xff]
  %v1632 = vld [vmem:[%s664 + $0x58] sm:$0xff]
  %v1633 = vld [vmem:[%s664 + $0x60] sm:$0xff]
  %v1634 = vld [vmem:[%s664 + $0x68] sm:$0xff]
  %v1635 = vld [vmem:[%s664 + $0x70] sm:$0xff]
  %v1636 = vld [vmem:[%s664 + $0x78] sm:$0xff]
  %v1638 = vsel %vm44, %v1619, 0
  %v1641 = vsel %vm44, %v1620, 0
  %1643 = vmatprep.subr.mxu0 %v1622
  %1644 = vmatpush1.msra.mxu0 %v1621
  %1645 = vmatprep.subr.mxu0 %v1624
  %1646 = vmatpush1.msra.mxu0 %v1623
  %1647 = vmatprep.subr.mxu0 %v1626
  %1648 = vmatpush1.msra.mxu0 %v1625
  %1649 = vmatprep.subr.mxu0 %v1628
  %1650 = vmatpush1.msra.mxu0 %v1627
  %1651 = vmatprep.subr.mxu0 %v1630
  %1652 = vmatpush1.msra.mxu0 %v1629
  %1653 = vmatprep.subr.mxu0 %v1632
  %1654 = vmatpush1.msra.mxu0 %v1631
  %1655 = vmatprep.subr.mxu0 %v1634
  %1656 = vmatpush1.msra.mxu0 %v1633
  %1657 = vmatprep.subr.mxu0 %v1636
  %1658 = vmatpush1.msra.mxu0 %v1635
  %1659 = vmatprep.subr.mxu0 0.0
  %1660 = vmatpush1.msra.mxu0 0.0
  %1661 = vmatprep.subr.mxu0 0.0
  %1662 = vmatpush1.msra.mxu0 0.0
  %1663 = vmatprep.subr.mxu0 0.0
  %1664 = vmatpush1.msra.mxu0 0.0
  %1665 = vmatprep.subr.mxu0 0.0
  %1666 = vmatpush1.msra.mxu0 0.0
  %1667 = vmatprep.subr.mxu0 0.0
  %1668 = vmatpush1.msra.mxu0 0.0
  %1669 = vmatprep.subr.mxu0 0.0
  %1670 = vmatpush1.msra.mxu0 0.0
  %1671 = vmatprep.subr.mxu0 0.0
  %1672 = vmatpush1.msra.mxu0 0.0
  %1673 = vmatprep.subr.mxu0 0.0
  %1674 = vmatpush1.msra.mxu0 0.0
  %1675 = vmatprep.subr.mxu0 0.0
  %1676 = vmatpush1.msra.mxu0 0.0
  %1677 = vmatprep.subr.mxu0 0.0
  %1678 = vmatpush1.msra.mxu0 0.0
  %1679 = vmatprep.subr.mxu0 0.0
  %1680 = vmatpush1.msra.mxu0 0.0
  %1681 = vmatprep.subr.mxu0 0.0
  %1682 = vmatpush1.msra.mxu0 0.0
  %1683 = vmatprep.subr.mxu0 0.0
  %1684 = vmatpush1.msra.mxu0 0.0
  %1685 = vmatprep.subr.mxu0 0.0
  %1686 = vmatpush1.msra.mxu0 0.0
  %1687 = vmatprep.subr.mxu0 0.0
  %1688 = vmatpush1.msra.mxu0 0.0
  %1689 = vmatprep.subr.mxu0 0.0
  %1690 = vmatpush1.msra.mxu0 0.0
  %1691 = vmatprep.subr.mxu0 0.0
  %1692 = vmatpush1.msra.mxu0 0.0
  %1693 = vmatprep.subr.mxu0 0.0
  %1694 = vmatpush1.msra.mxu0 0.0
  %1695 = vmatprep.subr.mxu0 0.0
  %1696 = vmatpush1.msra.mxu0 0.0
  %1697 = vmatprep.subr.mxu0 0.0
  %1698 = vmatpush1.msra.mxu0 0.0
  %1699 = vmatprep.subr.mxu0 0.0
  %1700 = vmatpush1.msra.mxu0 0.0
  %1701 = vmatprep.subr.mxu0 0.0
  %1702 = vmatpush1.msra.mxu0 0.0
  %1703 = vmatprep.subr.mxu0 0.0
  %1704 = vmatpush1.msra.mxu0 0.0
  %1705 = vmatprep.subr.mxu0 0.0
  %1706 = vmatpush1.msra.mxu0 0.0
  %1707 = vmatprep.mubr.f32.mxu0 0.0
  %1708 = vmatmul.mubr.f32.gmra.mrb[0].mxu0 %v1638
  %v1709 = vpop.f32.mrb[0].mxu0
  %v1710 = vadd.f32 0.0, %v1709
  %v1711 = vpop.f32.mrb[0].mxu0
  %v1712 = vadd.f32 0.0, %v1711
  %1713 = vmatprep.mubr.f32.mxu0 0.0
  %1714 = vmatmul.mubr.f32.gmra.mrb[0].mxu0 %v1641
  %v1715 = vpop.f32.mrb[0].mxu0
  %v1716 = vadd.f32 0.0, %v1715
  %v1717 = vpop.f32.mrb[0].mxu0
  %v1718 = vadd.f32 0.0, %v1717
  %1719 = vdwg.mxu0
  %v1720 = vadd.f32 %v1615, %v1710
  %v1721 = vadd.f32 %v1616, %v1712
  %v1722 = vadd.f32 %v1617, %v1716
  %v1723 = vadd.f32 %v1618, %v1718
  %v1724 = vld [vmem:[%s768] sm:$0xff]
  %v1725 = vld [vmem:[%s768 + $0x8] sm:$0xff]
  %v1726 = vld [vmem:[%s768 + $0x10] sm:$0xff]
  %v1727 = vld [vmem:[%s768 + $0x18] sm:$0xff]
  %v1728 = vld [vmem:[%s768 + $0x20] sm:$0xff]
  %v1729 = vld [vmem:[%s768 + $0x28] sm:$0xff]
  %v1730 = vld [vmem:[%s768 + $0x30] sm:$0xff]
  %v1731 = vld [vmem:[%s768 + $0x38] sm:$0xff]
  %v1732 = vld [vmem:[%s768 + $0x40] sm:$0xff]
  %v1733 = vld [vmem:[%s768 + $0x48] sm:$0xff]
  %v1734 = vld [vmem:[%s768 + $0x50] sm:$0xff]
  %v1735 = vld [vmem:[%s768 + $0x58] sm:$0xff]
  %v1736 = vld [vmem:[%s768 + $0x60] sm:$0xff]
  %v1737 = vld [vmem:[%s768 + $0x68] sm:$0xff]
  %v1738 = vld [vmem:[%s768 + $0x70] sm:$0xff]
  %v1739 = vld [vmem:[%s768 + $0x78] sm:$0xff]
  %1740 = vrot.lane.b32.xlu0 %v1619, 124
  %v1741 = vpop.permute.xlu0 %1740
  %1742 = vrot.lane.b32.xlu0 %v1620, 124
  %v1743 = vpop.permute.xlu0 %1742
  %v1744 = vsel %vm44, %v1741, 0
  %v1746 = vsel %vm44, %v1743, 0
  %1748 = vmatprep.subr.mxu0 %v1725
  %1749 = vmatpush1.msra.mxu0 %v1724
  %1750 = vmatprep.subr.mxu0 %v1727
  %1751 = vmatpush1.msra.mxu0 %v1726
  %1752 = vmatprep.subr.mxu0 %v1729
  %1753 = vmatpush1.msra.mxu0 %v1728
  %1754 = vmatprep.subr.mxu0 %v1731
  %1755 = vmatpush1.msra.mxu0 %v1730
  %1756 = vmatprep.subr.mxu0 %v1733
  %1757 = vmatpush1.msra.mxu0 %v1732
  %1758 = vmatprep.subr.mxu0 %v1735
  %1759 = vmatpush1.msra.mxu0 %v1734
  %1760 = vmatprep.subr.mxu0 %v1737
  %1761 = vmatpush1.msra.mxu0 %v1736
  %1762 = vmatprep.subr.mxu0 %v1739
  %1763 = vmatpush1.msra.mxu0 %v1738
  %1764 = vmatprep.subr.mxu0 0.0
  %1765 = vmatpush1.msra.mxu0 0.0
  %1766 = vmatprep.subr.mxu0 0.0
  %1767 = vmatpush1.msra.mxu0 0.0
  %1768 = vmatprep.subr.mxu0 0.0
  %1769 = vmatpush1.msra.mxu0 0.0
  %1770 = vmatprep.subr.mxu0 0.0
  %1771 = vmatpush1.msra.mxu0 0.0
  %1772 = vmatprep.subr.mxu0 0.0
  %1773 = vmatpush1.msra.mxu0 0.0
  %1774 = vmatprep.subr.mxu0 0.0
  %1775 = vmatpush1.msra.mxu0 0.0
  %1776 = vmatprep.subr.mxu0 0.0
  %1777 = vmatpush1.msra.mxu0 0.0
  %1778 = vmatprep.subr.mxu0 0.0
  %1779 = vmatpush1.msra.mxu0 0.0
  %1780 = vmatprep.subr.mxu0 0.0
  %1781 = vmatpush1.msra.mxu0 0.0
  %1782 = vmatprep.subr.mxu0 0.0
  %1783 = vmatpush1.msra.mxu0 0.0
  %1784 = vmatprep.subr.mxu0 0.0
  %1785 = vmatpush1.msra.mxu0 0.0
  %1786 = vmatprep.subr.mxu0 0.0
  %1787 = vmatpush1.msra.mxu0 0.0
  %1788 = vmatprep.subr.mxu0 0.0
  %1789 = vmatpush1.msra.mxu0 0.0
  %1790 = vmatprep.subr.mxu0 0.0
  %1791 = vmatpush1.msra.mxu0 0.0
  %1792 = vmatprep.subr.mxu0 0.0
  %1793 = vmatpush1.msra.mxu0 0.0
  %1794 = vmatprep.subr.mxu0 0.0
  %1795 = vmatpush1.msra.mxu0 0.0
  %1796 = vmatprep.subr.mxu0 0.0
  %1797 = vmatpush1.msra.mxu0 0.0
  %1798 = vmatprep.subr.mxu0 0.0
  %1799 = vmatpush1.msra.mxu0 0.0
  %1800 = vmatprep.subr.mxu0 0.0
  %1801 = vmatpush1.msra.mxu0 0.0
  %1802 = vmatprep.subr.mxu0 0.0
  %1803 = vmatpush1.msra.mxu0 0.0
  %1804 = vmatprep.subr.mxu0 0.0
  %1805 = vmatpush1.msra.mxu0 0.0
  %1806 = vmatprep.subr.mxu0 0.0
  %1807 = vmatpush1.msra.mxu0 0.0
  %1808 = vmatprep.subr.mxu0 0.0
  %1809 = vmatpush1.msra.mxu0 0.0
  %1810 = vmatprep.subr.mxu0 0.0
  %1811 = vmatpush1.msra.mxu0 0.0
  %1812 = vmatprep.mubr.f32.mxu0 0.0
  %1813 = vmatmul.mubr.f32.gmra.mrb[0].mxu0 %v1744
  %v1814 = vpop.f32.mrb[0].mxu0
  %v1815 = vadd.f32 0.0, %v1814
  %v1816 = vpop.f32.mrb[0].mxu0
  %v1817 = vadd.f32 0.0, %v1816
  %1818 = vmatprep.mubr.f32.mxu0 0.0
  %1819 = vmatmul.mubr.f32.gmra.mrb[0].mxu0 %v1746
  %v1820 = vpop.f32.mrb[0].mxu0
  %v1821 = vadd.f32 0.0, %v1820
  %v1822 = vpop.f32.mrb[0].mxu0
  %v1823 = vadd.f32 0.0, %v1822
  %1824 = vdwg.mxu0
  %v1825 = vadd.f32 %v1720, %v1815
  %v1826 = vadd.f32 %v1721, %v1817
  %v1827 = vadd.f32 %v1722, %v1821
  %v1828 = vadd.f32 %v1723, %v1823
  %v1829 = vld [vmem:[%s874] sm:$0xff]
  %v1830 = vld [vmem:[%s874 + $0x8] sm:$0xff]
  %v1831 = vld [vmem:[%s874 + $0x10] sm:$0xff]
  %v1832 = vld [vmem:[%s874 + $0x18] sm:$0xff]
  %v1833 = vld [vmem:[%s874 + $0x20] sm:$0xff]
  %v1834 = vld [vmem:[%s874 + $0x28] sm:$0xff]
  %v1835 = vld [vmem:[%s874 + $0x30] sm:$0xff]
  %v1836 = vld [vmem:[%s874 + $0x38] sm:$0xff]
  %v1837 = vld [vmem:[%s874 + $0x40] sm:$0xff]
  %v1838 = vld [vmem:[%s874 + $0x48] sm:$0xff]
  %v1839 = vld [vmem:[%s874 + $0x50] sm:$0xff]
  %v1840 = vld [vmem:[%s874 + $0x58] sm:$0xff]
  %v1841 = vld [vmem:[%s874 + $0x60] sm:$0xff]
  %v1842 = vld [vmem:[%s874 + $0x68] sm:$0xff]
  %v1843 = vld [vmem:[%s874 + $0x70] sm:$0xff]
  %v1844 = vld [vmem:[%s874 + $0x78] sm:$0xff]
  %1845 = vrot.lane.b32.xlu0 %v1619, 120
  %v1846 = vpop.permute.xlu0 %1845
  %1847 = vrot.lane.b32.xlu0 %v1620, 120
  %v1848 = vpop.permute.xlu0 %1847
  %v1849 = vsel %vm44, %v1846, 0
  %v1851 = vsel %vm44, %v1848, 0
  %1853 = vmatprep.subr.mxu0 %v1830
  %1854 = vmatpush1.msra.mxu0 %v1829
  %1855 = vmatprep.subr.mxu0 %v1832
  %1856 = vmatpush1.msra.mxu0 %v1831
  %1857 = vmatprep.subr.mxu0 %v1834
  %1858 = vmatpush1.msra.mxu0 %v1833
  %1859 = vmatprep.subr.mxu0 %v1836
  %1860 = vmatpush1.msra.mxu0 %v1835
  %1861 = vmatprep.subr.mxu0 %v1838
  %1862 = vmatpush1.msra.mxu0 %v1837
  %1863 = vmatprep.subr.mxu0 %v1840
  %1864 = vmatpush1.msra.mxu0 %v1839
  %1865 = vmatprep.subr.mxu0 %v1842
  %1866 = vmatpush1.msra.mxu0 %v1841
  %1867 = vmatprep.subr.mxu0 %v1844
  %1868 = vmatpush1.msra.mxu0 %v1843
  %1869 = vmatprep.subr.mxu0 0.0
  %1870 = vmatpush1.msra.mxu0 0.0
  %1871 = vmatprep.subr.mxu0 0.0
  %1872 = vmatpush1.msra.mxu0 0.0
  %1873 = vmatprep.subr.mxu0 0.0
  %1874 = vmatpush1.msra.mxu0 0.0
  %1875 = vmatprep.subr.mxu0 0.0
  %1876 = vmatpush1.msra.mxu0 0.0
  %1877 = vmatprep.subr.mxu0 0.0
  %1878 = vmatpush1.msra.mxu0 0.0
  %1879 = vmatprep.subr.mxu0 0.0
  %1880 = vmatpush1.msra.mxu0 0.0
  %1881 = vmatprep.subr.mxu0 0.0
  %1882 = vmatpush1.msra.mxu0 0.0
  %1883 = vmatprep.subr.mxu0 0.0
  %1884 = vmatpush1.msra.mxu0 0.0
  %1885 = vmatprep.subr.mxu0 0.0
  %1886 = vmatpush1.msra.mxu0 0.0
  %1887 = vmatprep.subr.mxu0 0.0
  %1888 = vmatpush1.msra.mxu0 0.0
  %1889 = vmatprep.subr.mxu0 0.0
  %1890 = vmatpush1.msra.mxu0 0.0
  %1891 = vmatprep.subr.mxu0 0.0
  %1892 = vmatpush1.msra.mxu0 0.0
  %1893 = vmatprep.subr.mxu0 0.0
  %1894 = vmatpush1.msra.mxu0 0.0
  %1895 = vmatprep.subr.mxu0 0.0
  %1896 = vmatpush1.msra.mxu0 0.0
  %1897 = vmatprep.subr.mxu0 0.0
  %1898 = vmatpush1.msra.mxu0 0.0
  %1899 = vmatprep.subr.mxu0 0.0
  %1900 = vmatpush1.msra.mxu0 0.0
  %1901 = vmatprep.subr.mxu0 0.0
  %1902 = vmatpush1.msra.mxu0 0.0
  %1903 = vmatprep.subr.mxu0 0.0
  %1904 = vmatpush1.msra.mxu0 0.0
  %1905 = vmatprep.subr.mxu0 0.0
  %1906 = vmatpush1.msra.mxu0 0.0
  %1907 = vmatprep.subr.mxu0 0.0
  %1908 = vmatpush1.msra.mxu0 0.0
  %1909 = vmatprep.subr.mxu0 0.0
  %1910 = vmatpush1.msra.mxu0 0.0
  %1911 = vmatprep.subr.mxu0 0.0
  %1912 = vmatpush1.msra.mxu0 0.0
  %1913 = vmatprep.subr.mxu0 0.0
  %1914 = vmatpush1.msra.mxu0 0.0
  %1915 = vmatprep.subr.mxu0 0.0
  %1916 = vmatpush1.msra.mxu0 0.0
  %1917 = vmatprep.mubr.f32.mxu0 0.0
  %1918 = vmatmul.mubr.f32.gmra.mrb[0].mxu0 %v1849
  %v1919 = vpop.f32.mrb[0].mxu0
  %v1920 = vadd.f32 0.0, %v1919
  %v1921 = vpop.f32.mrb[0].mxu0
  %v1922 = vadd.f32 0.0, %v1921
  %1923 = vmatprep.mubr.f32.mxu0 0.0
  %1924 = vmatmul.mubr.f32.gmra.mrb[0].mxu0 %v1851
  %v1925 = vpop.f32.mrb[0].mxu0
  %v1926 = vadd.f32 0.0, %v1925
  %v1927 = vpop.f32.mrb[0].mxu0
  %v1928 = vadd.f32 0.0, %v1927
  %1929 = vdwg.mxu0
  %v1930 = vadd.f32 %v1825, %v1920
  %v1931 = vadd.f32 %v1826, %v1922
  %v1932 = vadd.f32 %v1827, %v1926
  %v1933 = vadd.f32 %v1828, %v1928
  %v1934 = vmax.f32 %v1930, 0.0
  %v1935 = vmax.f32 %v1931, 0.0
  %v1936 = vmax.f32 %v1932, 0.0
  %v1937 = vmax.f32 %v1933, 0.0
  %s1938 = scalar_lea.vmem %s3, 32
  %1939 = vst [vmem:[%s1938] sm:$0xff] %v1934
  %1940 = vst [vmem:[%s1938 + $0x8] sm:$0xff] %v1935
  %1941 = vst [vmem:[%s1938 + $0x10] sm:$0xff] %v1936
  %1942 = vst [vmem:[%s1938 + $0x18] sm:$0xff] %v1937
  // Predicated region
  $region14: #{block_forward.1} parent=0 // pred_check
    _
  $region15: #{block_forward.1} parent=0 // pred_check_branch
    %1944 = sbr.rel (0) target = $region17
  $region16: #{block_forward.1} parent=0 // pred_region
    _
  $region17: #{block_forward.1} parent=0 // pred_fallthru
    _
  // Predicated region
  $region18: #{block_forward.1} parent=0 // pred_check
    _
  $region19: #{block_forward.1} parent=0 // pred_check_branch
    %1946 = sbr.rel (0) target = $region21
  $region20: #{block_forward.1} parent=0 // pred_region
    _
  $region21: #{block_forward.1} parent=0 // pred_fallthru
    _

</llo_original>
